<compile_context>
chip_gen: v5e
topology: v5e:2x2
jax: 0.10.0
libtpu: 0.0.40
codegen_flags: <defaults>
</compile_context>

<pallas_src>
import jax
import jax.numpy as jnp
from jax.experimental import pallas as pl
from jax.experimental.pallas import tpu as pltpu

EPS = 1e-12                    # BERT LayerNorm eps
GELU_C = 0.7978845608028654    # sqrt(2/pi)


# ---------------------------------------------------------------------------
# In-kernel helpers (pure jnp, traced inside the Pallas kernel)
# ---------------------------------------------------------------------------
def _layernorm(x, gamma, beta):
    mu = jnp.mean(x, axis=-1, keepdims=True)
    var = jnp.mean((x - mu) ** 2, axis=-1, keepdims=True)
    return (x - mu) * jax.lax.rsqrt(var + EPS) * gamma + beta


def _gelu(x):
    # tanh approximation of GELU (transformers "gelu_new"); VPU + single EUP tanh.
    return 0.5 * x * (1.0 + jnp.tanh(GELU_C * (x + 0.044715 * x * x * x)))


# ---------------------------------------------------------------------------
# Fused kernel: embeddings -> L encoder layers -> pooler -> classifier
# ---------------------------------------------------------------------------
def bert_fused_kernel(ids_ref, mask_ref, we_ref, pt_ref, eg_ref, eb_ref,
                      wqkv_ref, bqkv_ref, wo_ref, bo_ref, g1_ref, b1_ref,
                      w1_ref, fb1_ref, w2_ref, fb2_ref, g2_ref, b2_ref,
                      wp_ref, bp_ref, wc_ref, bc_ref, o_ref):
    f32 = jnp.float32
    BS = ids_ref.shape[0]
    V, H = we_ref.shape
    B, S = mask_ref.shape
    L = wqkv_ref.shape[0]

    # ---- embeddings: token gather as one-hot matmul (MXU), + (pos + type), LayerNorm ----
    ids = ids_ref[...]                                              # (BS, 1) int32
    iota = jax.lax.broadcasted_iota(jnp.int32, (BS, V), 1)
    onehot = (ids == iota).astype(f32)                              # (BS, V)
    x = jnp.dot(onehot, we_ref[...], preferred_element_type=f32)    # (BS, H)
    x = x + jnp.tile(pt_ref[...], (B, 1))                           # pos+type, tiled over batch
    x = _layernorm(x, eg_ref[...], eb_ref[...])

    # HF-style additive attention mask, broadcast over query positions.
    bias = ((1.0 - mask_ref[...]) * (-10000.0))[:, None, :]         # (B, 1, S)

    # ---- transformer encoder layers (unrolled; activation stays in VMEM) ----
    # NOTE: single attention head (head_dim == H) at this toy config; the 1/sqrt(d)
    # scale is pre-folded into the Q weights in the wrapper.
    for l in range(L):
        # fused QKV projection: one (BS,H) @ (H,3H) matmul
        qkv = jnp.dot(x, wqkv_ref[l], preferred_element_type=f32) + bqkv_ref[l]
        q = qkv[:, 0 * H:1 * H].reshape(B, S, H)
        k = qkv[:, 1 * H:2 * H].reshape(B, S, H)
        v = qkv[:, 2 * H:3 * H].reshape(B, S, H)

        scores = jnp.einsum('bqd,bkd->bqk', q, k,
                            preferred_element_type=f32) + bias      # (B, S, S)
        m = jnp.max(scores, axis=-1, keepdims=True)
        p = jnp.exp(scores - m)
        inv = pl.reciprocal(jnp.sum(p, axis=-1, keepdims=True), approx=True)
        ctx = jnp.einsum('bqk,bkd->bqd', p, v,
                         preferred_element_type=f32) * inv          # (B, S, H)
        ctx2d = ctx.reshape(BS, H)

        attn = jnp.dot(ctx2d, wo_ref[l], preferred_element_type=f32) + bo_ref[l]
        x = _layernorm(attn + x, g1_ref[l], b1_ref[l])

        h = _gelu(jnp.dot(x, w1_ref[l], preferred_element_type=f32) + fb1_ref[l])
        y = jnp.dot(h, w2_ref[l], preferred_element_type=f32) + fb2_ref[l]
        x = _layernorm(y + x, g2_ref[l], b2_ref[l])

    # ---- pooler on CLS rows only -> dropout(identity at eval) -> classifier ----
    cls = x.reshape(B, S, H)[:, 0, :]                                # (B, H) first tokens
    pooled = jnp.tanh(jnp.dot(cls, wp_ref[...],
                              preferred_element_type=f32) + bp_ref[...])
    # classifier weight stored transposed (1, H) -> lane-dense (1, B) output
    o_ref[...] = (jnp.einsum('oh,bh->ob', wc_ref[...], pooled,
                             preferred_element_type=f32) + bc_ref[...])


# ---------------------------------------------------------------------------
# Parameter init (deterministic, synthetic "bert-base"-style small config)
# ---------------------------------------------------------------------------
def init_params(key, vocab=100, max_pos=16, type_vocab=2, H=32, I=64, n_layers=2):
    def nrm(k, shape, std=0.02):
        return (std * jax.random.normal(k, shape)).astype(jnp.float32)

    keys = iter(jax.random.split(key, 64))
    params = {
        'word_emb': nrm(next(keys), (vocab, H)),
        'pos_emb':  nrm(next(keys), (max_pos, H)),
        'type_emb': nrm(next(keys), (type_vocab, H)),
        'emb_ln_g': jnp.ones((1, H), jnp.float32),
        'emb_ln_b': jnp.zeros((1, H), jnp.float32),
        'layers': [],
        'pool_w': nrm(next(keys), (H, H)),
        'pool_b': jnp.zeros((1, H), jnp.float32),
        'cls_w':  nrm(next(keys), (H, 1)),     # nn.Linear(hidden_size, 1)
        'cls_b':  jnp.zeros((1, 1), jnp.float32),
    }
    for _ in range(n_layers):
        params['layers'].append({
            'wq': nrm(next(keys), (H, H)), 'bq': jnp.zeros((1, H), jnp.float32),
            'wk': nrm(next(keys), (H, H)), 'bk': jnp.zeros((1, H), jnp.float32),
            'wv': nrm(next(keys), (H, H)), 'bv': jnp.zeros((1, H), jnp.float32),
            'wo': nrm(next(keys), (H, H)), 'bo': jnp.zeros((1, H), jnp.float32),
            'ln1_g': jnp.ones((1, H), jnp.float32), 'ln1_b': jnp.zeros((1, H), jnp.float32),
            'w1': nrm(next(keys), (H, I)), 'b1': jnp.zeros((1, I), jnp.float32),
            'w2': nrm(next(keys), (I, H)), 'b2': jnp.zeros((1, H), jnp.float32),
            'ln2_g': jnp.ones((1, H), jnp.float32), 'ln2_b': jnp.zeros((1, H), jnp.float32),
        })
    return params


# ---------------------------------------------------------------------------
# Forward pass: BertCitationClassifier.forward(input_ids, attention_mask)
# ---------------------------------------------------------------------------
def bert_citation_classifier(params, input_ids, attention_mask):
    B, S = input_ids.shape
    f32 = jnp.float32
    layers = params['layers']
    H = params['word_emb'].shape[1]
    scale = 1.0 / (float(H) ** 0.5)          # single head: head_dim == H

    # --- parameter packing (tiny; constant-folded under jit since params are closed over) ---
    pt = params['pos_emb'][:S] + params['type_emb'][0][None, :]      # token_type_ids == 0
    # attention scale folded into Q weights/bias -> no per-layer (B,S,S) scale multiply
    wqkv = jnp.stack([jnp.concatenate([l['wq'] * scale, l['wk'], l['wv']], axis=1)
                      for l in layers])
    bqkv = jnp.stack([jnp.concatenate([l['bq'] * scale, l['bk'], l['bv']], axis=1)
                      for l in layers])
    wo = jnp.stack([l['wo'] for l in layers]);  bo = jnp.stack([l['bo'] for l in layers])
    g1 = jnp.stack([l['ln1_g'] for l in layers]); b1 = jnp.stack([l['ln1_b'] for l in layers])
    w1 = jnp.stack([l['w1'] for l in layers]);  fb1 = jnp.stack([l['b1'] for l in layers])
    w2 = jnp.stack([l['w2'] for l in layers]);  fb2 = jnp.stack([l['b2'] for l in layers])
    g2 = jnp.stack([l['ln2_g'] for l in layers]); b2 = jnp.stack([l['ln2_b'] for l in layers])

    ids2d = input_ids.reshape(B * S, 1).astype(jnp.int32)
    mask_f = attention_mask.astype(f32)                              # (B, S)
    wc_t = params['cls_w'].T                                         # (1, H)

    args = (ids2d, mask_f,
            params['word_emb'].astype(f32), pt.astype(f32),
            params['emb_ln_g'], params['emb_ln_b'],
            wqkv, bqkv, wo, bo, g1, b1, w1, fb1, w2, fb2, g2, b2,
            params['pool_w'], params['pool_b'], wc_t, params['cls_b'])

    out = pl.pallas_call(
        bert_fused_kernel,
        out_shape=jax.ShapeDtypeStruct((1, B), f32),
        in_specs=[pl.BlockSpec(memory_space=pltpu.MemorySpace.VMEM) for _ in args],
        out_specs=pl.BlockSpec(memory_space=pltpu.MemorySpace.VMEM),
    )(*args)
    return out.T                                                     # (B, 1) logits


# ---------------------------------------------------------------------------
if __name__ == "__main__":
    key = jax.random.PRNGKey(0)
    k_param, k_ids = jax.random.split(key)

    B, S, VOCAB = 2, 8, 100
    params = init_params(k_param, vocab=VOCAB, max_pos=16, H=32, I=64, n_layers=2)

    input_ids = jax.random.randint(k_ids, (B, S), 0, VOCAB, dtype=jnp.int32)
    attention_mask = jnp.ones((B, S), jnp.int32).at[1, 6:].set(0)   # second example padded

    logits = jax.jit(lambda ids, m: bert_citation_classifier(params, ids, m))(
        input_ids, attention_mask)
    logits = jax.block_until_ready(logits)

    assert logits.shape == (B, 1) and logits.dtype == jnp.float32
    assert bool(jnp.all(jnp.isfinite(logits)))
    print("KERNEL_OK")
</pallas_src>

<mosaic_0001>
module attributes {stable_mosaic.version = 11 : i64} {
  func.func @bert_fused_kernel(%arg0: memref<16x1xi32, #tpu.memory_space<vmem>>, %arg1: memref<2x8xf32, #tpu.memory_space<vmem>>, %arg2: memref<100x32xf32, #tpu.memory_space<vmem>>, %arg3: memref<8x32xf32, #tpu.memory_space<vmem>>, %arg4: memref<1x32xf32, #tpu.memory_space<vmem>>, %arg5: memref<1x32xf32, #tpu.memory_space<vmem>>, %arg6: memref<2x32x96xf32, #tpu.memory_space<vmem>>, %arg7: memref<2x1x96xf32, #tpu.memory_space<vmem>>, %arg8: memref<2x32x32xf32, #tpu.memory_space<vmem>>, %arg9: memref<2x1x32xf32, #tpu.memory_space<vmem>>, %arg10: memref<2x1x32xf32, #tpu.memory_space<vmem>>, %arg11: memref<2x1x32xf32, #tpu.memory_space<vmem>>, %arg12: memref<2x32x64xf32, #tpu.memory_space<vmem>>, %arg13: memref<2x1x64xf32, #tpu.memory_space<vmem>>, %arg14: memref<2x64x32xf32, #tpu.memory_space<vmem>>, %arg15: memref<2x1x32xf32, #tpu.memory_space<vmem>>, %arg16: memref<2x1x32xf32, #tpu.memory_space<vmem>>, %arg17: memref<2x1x32xf32, #tpu.memory_space<vmem>>, %arg18: memref<32x32xf32, #tpu.memory_space<vmem>>, %arg19: memref<1x32xf32, #tpu.memory_space<vmem>>, %arg20: memref<1x32xf32, #tpu.memory_space<vmem>>, %arg21: memref<1x1xf32, #tpu.memory_space<vmem>>, %arg22: memref<1x2xf32, #tpu.memory_space<vmem>>) attributes {dimension_semantics = [], scalar_prefetch = 0 : i64, scratch_operands = 0 : i64, tpu.core_type = #tpu.core_type<tc>} {
    %c0 = arith.constant 0 : index
    %c0_0 = arith.constant 0 : index
    %0 = vector.load %arg0[%c0, %c0_0] : memref<16x1xi32, #tpu.memory_space<vmem>>, vector<16x1xi32>
    %1 = tpu.iota {dimensions = array<i32: 1>} : vector<16x100xi32>
    %2 = vector.broadcast %0 : vector<16x1xi32> to vector<16x100xi32>
    %3 = arith.cmpi eq, %2, %1 : vector<16x100xi32>
    %4 = arith.extui %3 : vector<16x100xi1> to vector<16x100xi32>
    %5 = arith.sitofp %4 : vector<16x100xi32> to vector<16x100xf32>
    %c0_1 = arith.constant 0 : index
    %c0_2 = arith.constant 0 : index
    %6 = vector.load %arg2[%c0_1, %c0_2] : memref<100x32xf32, #tpu.memory_space<vmem>>, vector<100x32xf32>
    %cst = arith.constant dense<0.000000e+00> : vector<16x32xf32>
    %7 = tpu.matmul %5, %6, %cst {dimension_numbers = #tpu.dot_dimension_numbers<[1], [0], [0], [1], [0, 0, 1, 1], [], []>} : vector<16x100xf32>, vector<100x32xf32>, vector<16x32xf32> -> vector<16x32xf32>
    %c0_3 = arith.constant 0 : index
    %c0_4 = arith.constant 0 : index
    %8 = vector.load %arg3[%c0_3, %c0_4] : memref<8x32xf32, #tpu.memory_space<vmem>>, vector<8x32xf32>
    %9 = tpu.concatenate %8, %8 in 0 : vector<8x32xf32>, vector<8x32xf32> -> vector<16x32xf32>
    %10 = arith.addf %7, %9 : vector<16x32xf32>
    %c0_5 = arith.constant 0 : index
    %c0_6 = arith.constant 0 : index
    %11 = vector.load %arg4[%c0_5, %c0_6] : memref<1x32xf32, #tpu.memory_space<vmem>>, vector<1x32xf32>
    %c0_7 = arith.constant 0 : index
    %c0_8 = arith.constant 0 : index
    %12 = vector.load %arg5[%c0_7, %c0_8] : memref<1x32xf32, #tpu.memory_space<vmem>>, vector<1x32xf32>
    %cst_9 = arith.constant dense<0.000000e+00> : vector<16xf32>
    %13 = vector.multi_reduction <add>, %10, %cst_9 [1] : vector<16x32xf32> to vector<16xf32>
    %14 = vector.shape_cast %13 : vector<16xf32> to vector<16x1xf32>
    %cst_10 = arith.constant 3.200000e+01 : f32
    %15 = vector.broadcast %cst_10 : f32 to vector<16x1xf32>
    %16 = arith.divf %14, %15 : vector<16x1xf32>
    %17 = vector.broadcast %16 : vector<16x1xf32> to vector<16x32xf32>
    %18 = arith.subf %10, %17 : vector<16x32xf32>
    %19 = arith.mulf %18, %18 : vector<16x32xf32>
    %cst_11 = arith.constant dense<0.000000e+00> : vector<16xf32>
    %20 = vector.multi_reduction <add>, %19, %cst_11 [1] : vector<16x32xf32> to vector<16xf32>
    %21 = vector.shape_cast %20 : vector<16xf32> to vector<16x1xf32>
    %cst_12 = arith.constant 3.200000e+01 : f32
    %22 = vector.broadcast %cst_12 : f32 to vector<16x1xf32>
    %23 = arith.divf %21, %22 : vector<16x1xf32>
    %24 = vector.broadcast %16 : vector<16x1xf32> to vector<16x32xf32>
    %25 = arith.subf %10, %24 : vector<16x32xf32>
    %cst_13 = arith.constant 9.99999996E-13 : f32
    %26 = vector.broadcast %cst_13 : f32 to vector<16x1xf32>
    %27 = arith.addf %23, %26 : vector<16x1xf32>
    %28 = math.rsqrt %27 : vector<16x1xf32>
    %29 = vector.broadcast %28 : vector<16x1xf32> to vector<16x32xf32>
    %30 = arith.mulf %25, %29 : vector<16x32xf32>
    %31 = vector.broadcast %11 : vector<1x32xf32> to vector<16x32xf32>
    %32 = arith.mulf %30, %31 : vector<16x32xf32>
    %33 = vector.broadcast %12 : vector<1x32xf32> to vector<16x32xf32>
    %34 = arith.addf %32, %33 : vector<16x32xf32>
    %c0_14 = arith.constant 0 : index
    %c0_15 = arith.constant 0 : index
    %35 = vector.load %arg1[%c0_14, %c0_15] : memref<2x8xf32, #tpu.memory_space<vmem>>, vector<2x8xf32>
    %cst_16 = arith.constant 1.000000e+00 : f32
    %36 = vector.broadcast %cst_16 : f32 to vector<2x8xf32>
    %37 = arith.subf %36, %35 : vector<2x8xf32>
    %cst_17 = arith.constant -1.000000e+04 : f32
    %38 = vector.broadcast %cst_17 : f32 to vector<2x8xf32>
    %39 = arith.mulf %37, %38 : vector<2x8xf32>
    %40 = vector.shape_cast %39 : vector<2x8xf32> to vector<2x1x8xf32>
    %c0_18 = arith.constant 0 : index
    %c0_19 = arith.constant 0 : index
    %c0_20 = arith.constant 0 : index
    %41 = vector.load %arg6[%c0_18, %c0_19, %c0_20] : memref<2x32x96xf32, #tpu.memory_space<vmem>>, vector<1x32x96xf32>
    %42 = vector.shape_cast %41 : vector<1x32x96xf32> to vector<32x96xf32>
    %cst_21 = arith.constant dense<0.000000e+00> : vector<16x96xf32>
    %43 = tpu.matmul %34, %42, %cst_21 {dimension_numbers = #tpu.dot_dimension_numbers<[1], [0], [0], [1], [0, 0, 1, 1], [], []>} : vector<16x32xf32>, vector<32x96xf32>, vector<16x96xf32> -> vector<16x96xf32>
    %c0_22 = arith.constant 0 : index
    %c0_23 = arith.constant 0 : index
    %c0_24 = arith.constant 0 : index
    %44 = vector.load %arg7[%c0_22, %c0_23, %c0_24] : memref<2x1x96xf32, #tpu.memory_space<vmem>>, vector<1x1x96xf32>
    %45 = vector.shape_cast %44 : vector<1x1x96xf32> to vector<1x96xf32>
    %46 = vector.broadcast %45 : vector<1x96xf32> to vector<16x96xf32>
    %47 = arith.addf %43, %46 : vector<16x96xf32>
    %48 = vector.extract_strided_slice %47 {offsets = [0, 0], sizes = [16, 32], strides = [1, 1]} : vector<16x96xf32> to vector<16x32xf32>
    %49 = vector.shape_cast %48 : vector<16x32xf32> to vector<2x8x32xf32>
    %50 = vector.extract_strided_slice %47 {offsets = [0, 32], sizes = [16, 32], strides = [1, 1]} : vector<16x96xf32> to vector<16x32xf32>
    %51 = vector.shape_cast %50 : vector<16x32xf32> to vector<2x8x32xf32>
    %52 = vector.extract_strided_slice %47 {offsets = [0, 64], sizes = [16, 32], strides = [1, 1]} : vector<16x96xf32> to vector<16x32xf32>
    %53 = vector.shape_cast %52 : vector<16x32xf32> to vector<2x8x32xf32>
    "tpu.trace_start"() <{level = 10 : i32, message = "bqd,bkd->bqk"}> : () -> ()
    %cst_25 = arith.constant dense<0.000000e+00> : vector<2x8x8xf32>
    %54 = tpu.matmul %49, %51, %cst_25 {dimension_numbers = #tpu.dot_dimension_numbers<[2], [2], [1], [1], [0, 0, 0, 1, 1, 1], [0], [0]>} : vector<2x8x32xf32>, vector<2x8x32xf32>, vector<2x8x8xf32> -> vector<2x8x8xf32>
    "tpu.trace_stop"() : () -> ()
    %55 = vector.broadcast %40 : vector<2x1x8xf32> to vector<2x8x8xf32>
    %56 = arith.addf %54, %55 : vector<2x8x8xf32>
    %cst_26 = arith.constant dense<0xFF800000> : vector<2x8xf32>
    %57 = vector.multi_reduction <maximumf>, %56, %cst_26 [2] : vector<2x8x8xf32> to vector<2x8xf32>
    %58 = vector.shape_cast %57 : vector<2x8xf32> to vector<2x8x1xf32>
    %59 = vector.broadcast %58 : vector<2x8x1xf32> to vector<2x8x8xf32>
    %60 = arith.subf %56, %59 : vector<2x8x8xf32>
    %61 = math.exp %60 : vector<2x8x8xf32>
    %cst_27 = arith.constant dense<0.000000e+00> : vector<2x8xf32>
    %62 = vector.multi_reduction <add>, %61, %cst_27 [2] : vector<2x8x8xf32> to vector<2x8xf32>
    %63 = vector.shape_cast %62 : vector<2x8xf32> to vector<2x8x1xf32>
    %64 = tpu.reciprocal %63 {approx = true} : vector<2x8x1xf32> -> vector<2x8x1xf32>
    "tpu.trace_start"() <{level = 10 : i32, message = "bqk,bkd->bqd"}> : () -> ()
    %cst_28 = arith.constant dense<0.000000e+00> : vector<2x8x32xf32>
    %65 = tpu.matmul %61, %53, %cst_28 {dimension_numbers = #tpu.dot_dimension_numbers<[2], [1], [1], [2], [0, 0, 0, 1, 1, 2], [0], [0]>} : vector<2x8x8xf32>, vector<2x8x32xf32>, vector<2x8x32xf32> -> vector<2x8x32xf32>
    "tpu.trace_stop"() : () -> ()
    %66 = vector.broadcast %64 : vector<2x8x1xf32> to vector<2x8x32xf32>
    %67 = arith.mulf %65, %66 : vector<2x8x32xf32>
    %68 = vector.shape_cast %67 : vector<2x8x32xf32> to vector<16x32xf32>
    %c0_29 = arith.constant 0 : index
    %c0_30 = arith.constant 0 : index
    %c0_31 = arith.constant 0 : index
    %69 = vector.load %arg8[%c0_29, %c0_30, %c0_31] : memref<2x32x32xf32, #tpu.memory_space<vmem>>, vector<1x32x32xf32>
    %70 = vector.shape_cast %69 : vector<1x32x32xf32> to vector<32x32xf32>
    %cst_32 = arith.constant dense<0.000000e+00> : vector<16x32xf32>
    %71 = tpu.matmul %68, %70, %cst_32 {dimension_numbers = #tpu.dot_dimension_numbers<[1], [0], [0], [1], [0, 0, 1, 1], [], []>} : vector<16x32xf32>, vector<32x32xf32>, vector<16x32xf32> -> vector<16x32xf32>
    %c0_33 = arith.constant 0 : index
    %c0_34 = arith.constant 0 : index
    %c0_35 = arith.constant 0 : index
    %72 = vector.load %arg9[%c0_33, %c0_34, %c0_35] : memref<2x1x32xf32, #tpu.memory_space<vmem>>, vector<1x1x32xf32>
    %73 = vector.shape_cast %72 : vector<1x1x32xf32> to vector<1x32xf32>
    %74 = vector.broadcast %73 : vector<1x32xf32> to vector<16x32xf32>
    %75 = arith.addf %71, %74 : vector<16x32xf32>
    %76 = arith.addf %75, %34 : vector<16x32xf32>
    %c0_36 = arith.constant 0 : index
    %c0_37 = arith.constant 0 : index
    %c0_38 = arith.constant 0 : index
    %77 = vector.load %arg10[%c0_36, %c0_37, %c0_38] : memref<2x1x32xf32, #tpu.memory_space<vmem>>, vector<1x1x32xf32>
    %78 = vector.shape_cast %77 : vector<1x1x32xf32> to vector<1x32xf32>
    %c0_39 = arith.constant 0 : index
    %c0_40 = arith.constant 0 : index
    %c0_41 = arith.constant 0 : index
    %79 = vector.load %arg11[%c0_39, %c0_40, %c0_41] : memref<2x1x32xf32, #tpu.memory_space<vmem>>, vector<1x1x32xf32>
    %80 = vector.shape_cast %79 : vector<1x1x32xf32> to vector<1x32xf32>
    %cst_42 = arith.constant dense<0.000000e+00> : vector<16xf32>
    %81 = vector.multi_reduction <add>, %76, %cst_42 [1] : vector<16x32xf32> to vector<16xf32>
    %82 = vector.shape_cast %81 : vector<16xf32> to vector<16x1xf32>
    %cst_43 = arith.constant 3.200000e+01 : f32
    %83 = vector.broadcast %cst_43 : f32 to vector<16x1xf32>
    %84 = arith.divf %82, %83 : vector<16x1xf32>
    %85 = vector.broadcast %84 : vector<16x1xf32> to vector<16x32xf32>
    %86 = arith.subf %76, %85 : vector<16x32xf32>
    %87 = arith.mulf %86, %86 : vector<16x32xf32>
    %cst_44 = arith.constant dense<0.000000e+00> : vector<16xf32>
    %88 = vector.multi_reduction <add>, %87, %cst_44 [1] : vector<16x32xf32> to vector<16xf32>
    %89 = vector.shape_cast %88 : vector<16xf32> to vector<16x1xf32>
    %cst_45 = arith.constant 3.200000e+01 : f32
    %90 = vector.broadcast %cst_45 : f32 to vector<16x1xf32>
    %91 = arith.divf %89, %90 : vector<16x1xf32>
    %92 = vector.broadcast %84 : vector<16x1xf32> to vector<16x32xf32>
    %93 = arith.subf %76, %92 : vector<16x32xf32>
    %cst_46 = arith.constant 9.99999996E-13 : f32
    %94 = vector.broadcast %cst_46 : f32 to vector<16x1xf32>
    %95 = arith.addf %91, %94 : vector<16x1xf32>
    %96 = math.rsqrt %95 : vector<16x1xf32>
    %97 = vector.broadcast %96 : vector<16x1xf32> to vector<16x32xf32>
    %98 = arith.mulf %93, %97 : vector<16x32xf32>
    %99 = vector.broadcast %78 : vector<1x32xf32> to vector<16x32xf32>
    %100 = arith.mulf %98, %99 : vector<16x32xf32>
    %101 = vector.broadcast %80 : vector<1x32xf32> to vector<16x32xf32>
    %102 = arith.addf %100, %101 : vector<16x32xf32>
    %c0_47 = arith.constant 0 : index
    %c0_48 = arith.constant 0 : index
    %c0_49 = arith.constant 0 : index
    %103 = vector.load %arg12[%c0_47, %c0_48, %c0_49] : memref<2x32x64xf32, #tpu.memory_space<vmem>>, vector<1x32x64xf32>
    %104 = vector.shape_cast %103 : vector<1x32x64xf32> to vector<32x64xf32>
    %cst_50 = arith.constant dense<0.000000e+00> : vector<16x64xf32>
    %105 = tpu.matmul %102, %104, %cst_50 {dimension_numbers = #tpu.dot_dimension_numbers<[1], [0], [0], [1], [0, 0, 1, 1], [], []>} : vector<16x32xf32>, vector<32x64xf32>, vector<16x64xf32> -> vector<16x64xf32>
    %c0_51 = arith.constant 0 : index
    %c0_52 = arith.constant 0 : index
    %c0_53 = arith.constant 0 : index
    %106 = vector.load %arg13[%c0_51, %c0_52, %c0_53] : memref<2x1x64xf32, #tpu.memory_space<vmem>>, vector<1x1x64xf32>
    %107 = vector.shape_cast %106 : vector<1x1x64xf32> to vector<1x64xf32>
    %108 = vector.broadcast %107 : vector<1x64xf32> to vector<16x64xf32>
    %109 = arith.addf %105, %108 : vector<16x64xf32>
    %cst_54 = arith.constant 5.000000e-01 : f32
    %110 = vector.broadcast %cst_54 : f32 to vector<16x64xf32>
    %111 = arith.mulf %110, %109 : vector<16x64xf32>
    %cst_55 = arith.constant 4.471500e-02 : f32
    %112 = vector.broadcast %cst_55 : f32 to vector<16x64xf32>
    %113 = arith.mulf %112, %109 : vector<16x64xf32>
    %114 = arith.mulf %113, %109 : vector<16x64xf32>
    %115 = arith.mulf %114, %109 : vector<16x64xf32>
    %116 = arith.addf %109, %115 : vector<16x64xf32>
    %cst_56 = arith.constant 0.797884583 : f32
    %117 = vector.broadcast %cst_56 : f32 to vector<16x64xf32>
    %118 = arith.mulf %117, %116 : vector<16x64xf32>
    %119 = math.tanh %118 : vector<16x64xf32>
    %cst_57 = arith.constant 1.000000e+00 : f32
    %120 = vector.broadcast %cst_57 : f32 to vector<16x64xf32>
    %121 = arith.addf %120, %119 : vector<16x64xf32>
    %122 = arith.mulf %111, %121 : vector<16x64xf32>
    %c0_58 = arith.constant 0 : index
    %c0_59 = arith.constant 0 : index
    %c0_60 = arith.constant 0 : index
    %123 = vector.load %arg14[%c0_58, %c0_59, %c0_60] : memref<2x64x32xf32, #tpu.memory_space<vmem>>, vector<1x64x32xf32>
    %124 = vector.shape_cast %123 : vector<1x64x32xf32> to vector<64x32xf32>
    %cst_61 = arith.constant dense<0.000000e+00> : vector<16x32xf32>
    %125 = tpu.matmul %122, %124, %cst_61 {dimension_numbers = #tpu.dot_dimension_numbers<[1], [0], [0], [1], [0, 0, 1, 1], [], []>} : vector<16x64xf32>, vector<64x32xf32>, vector<16x32xf32> -> vector<16x32xf32>
    %c0_62 = arith.constant 0 : index
    %c0_63 = arith.constant 0 : index
    %c0_64 = arith.constant 0 : index
    %126 = vector.load %arg15[%c0_62, %c0_63, %c0_64] : memref<2x1x32xf32, #tpu.memory_space<vmem>>, vector<1x1x32xf32>
    %127 = vector.shape_cast %126 : vector<1x1x32xf32> to vector<1x32xf32>
    %128 = vector.broadcast %127 : vector<1x32xf32> to vector<16x32xf32>
    %129 = arith.addf %125, %128 : vector<16x32xf32>
    %130 = arith.addf %129, %102 : vector<16x32xf32>
    %c0_65 = arith.constant 0 : index
    %c0_66 = arith.constant 0 : index
    %c0_67 = arith.constant 0 : index
    %131 = vector.load %arg16[%c0_65, %c0_66, %c0_67] : memref<2x1x32xf32, #tpu.memory_space<vmem>>, vector<1x1x32xf32>
    %132 = vector.shape_cast %131 : vector<1x1x32xf32> to vector<1x32xf32>
    %c0_68 = arith.constant 0 : index
    %c0_69 = arith.constant 0 : index
    %c0_70 = arith.constant 0 : index
    %133 = vector.load %arg17[%c0_68, %c0_69, %c0_70] : memref<2x1x32xf32, #tpu.memory_space<vmem>>, vector<1x1x32xf32>
    %134 = vector.shape_cast %133 : vector<1x1x32xf32> to vector<1x32xf32>
    %cst_71 = arith.constant dense<0.000000e+00> : vector<16xf32>
    %135 = vector.multi_reduction <add>, %130, %cst_71 [1] : vector<16x32xf32> to vector<16xf32>
    %136 = vector.shape_cast %135 : vector<16xf32> to vector<16x1xf32>
    %cst_72 = arith.constant 3.200000e+01 : f32
    %137 = vector.broadcast %cst_72 : f32 to vector<16x1xf32>
    %138 = arith.divf %136, %137 : vector<16x1xf32>
    %139 = vector.broadcast %138 : vector<16x1xf32> to vector<16x32xf32>
    %140 = arith.subf %130, %139 : vector<16x32xf32>
    %141 = arith.mulf %140, %140 : vector<16x32xf32>
    %cst_73 = arith.constant dense<0.000000e+00> : vector<16xf32>
    %142 = vector.multi_reduction <add>, %141, %cst_73 [1] : vector<16x32xf32> to vector<16xf32>
    %143 = vector.shape_cast %142 : vector<16xf32> to vector<16x1xf32>
    %cst_74 = arith.constant 3.200000e+01 : f32
    %144 = vector.broadcast %cst_74 : f32 to vector<16x1xf32>
    %145 = arith.divf %143, %144 : vector<16x1xf32>
    %146 = vector.broadcast %138 : vector<16x1xf32> to vector<16x32xf32>
    %147 = arith.subf %130, %146 : vector<16x32xf32>
    %cst_75 = arith.constant 9.99999996E-13 : f32
    %148 = vector.broadcast %cst_75 : f32 to vector<16x1xf32>
    %149 = arith.addf %145, %148 : vector<16x1xf32>
    %150 = math.rsqrt %149 : vector<16x1xf32>
    %151 = vector.broadcast %150 : vector<16x1xf32> to vector<16x32xf32>
    %152 = arith.mulf %147, %151 : vector<16x32xf32>
    %153 = vector.broadcast %132 : vector<1x32xf32> to vector<16x32xf32>
    %154 = arith.mulf %152, %153 : vector<16x32xf32>
    %155 = vector.broadcast %134 : vector<1x32xf32> to vector<16x32xf32>
    %156 = arith.addf %154, %155 : vector<16x32xf32>
    %c1 = arith.constant 1 : index
    %c0_76 = arith.constant 0 : index
    %c0_77 = arith.constant 0 : index
    %157 = vector.load %arg6[%c1, %c0_76, %c0_77] : memref<2x32x96xf32, #tpu.memory_space<vmem>>, vector<1x32x96xf32>
    %158 = vector.shape_cast %157 : vector<1x32x96xf32> to vector<32x96xf32>
    %cst_78 = arith.constant dense<0.000000e+00> : vector<16x96xf32>
    %159 = tpu.matmul %156, %158, %cst_78 {dimension_numbers = #tpu.dot_dimension_numbers<[1], [0], [0], [1], [0, 0, 1, 1], [], []>} : vector<16x32xf32>, vector<32x96xf32>, vector<16x96xf32> -> vector<16x96xf32>
    %c1_79 = arith.constant 1 : index
    %c0_80 = arith.constant 0 : index
    %c0_81 = arith.constant 0 : index
    %160 = vector.load %arg7[%c1_79, %c0_80, %c0_81] : memref<2x1x96xf32, #tpu.memory_space<vmem>>, vector<1x1x96xf32>
    %161 = vector.shape_cast %160 : vector<1x1x96xf32> to vector<1x96xf32>
    %162 = vector.broadcast %161 : vector<1x96xf32> to vector<16x96xf32>
    %163 = arith.addf %159, %162 : vector<16x96xf32>
    %164 = vector.extract_strided_slice %163 {offsets = [0, 0], sizes = [16, 32], strides = [1, 1]} : vector<16x96xf32> to vector<16x32xf32>
    %165 = vector.shape_cast %164 : vector<16x32xf32> to vector<2x8x32xf32>
    %166 = vector.extract_strided_slice %163 {offsets = [0, 32], sizes = [16, 32], strides = [1, 1]} : vector<16x96xf32> to vector<16x32xf32>
    %167 = vector.shape_cast %166 : vector<16x32xf32> to vector<2x8x32xf32>
    %168 = vector.extract_strided_slice %163 {offsets = [0, 64], sizes = [16, 32], strides = [1, 1]} : vector<16x96xf32> to vector<16x32xf32>
    %169 = vector.shape_cast %168 : vector<16x32xf32> to vector<2x8x32xf32>
    "tpu.trace_start"() <{level = 10 : i32, message = "bqd,bkd->bqk"}> : () -> ()
    %cst_82 = arith.constant dense<0.000000e+00> : vector<2x8x8xf32>
    %170 = tpu.matmul %165, %167, %cst_82 {dimension_numbers = #tpu.dot_dimension_numbers<[2], [2], [1], [1], [0, 0, 0, 1, 1, 1], [0], [0]>} : vector<2x8x32xf32>, vector<2x8x32xf32>, vector<2x8x8xf32> -> vector<2x8x8xf32>
    "tpu.trace_stop"() : () -> ()
    %171 = vector.broadcast %40 : vector<2x1x8xf32> to vector<2x8x8xf32>
    %172 = arith.addf %170, %171 : vector<2x8x8xf32>
    %cst_83 = arith.constant dense<0xFF800000> : vector<2x8xf32>
    %173 = vector.multi_reduction <maximumf>, %172, %cst_83 [2] : vector<2x8x8xf32> to vector<2x8xf32>
    %174 = vector.shape_cast %173 : vector<2x8xf32> to vector<2x8x1xf32>
    %175 = vector.broadcast %174 : vector<2x8x1xf32> to vector<2x8x8xf32>
    %176 = arith.subf %172, %175 : vector<2x8x8xf32>
    %177 = math.exp %176 : vector<2x8x8xf32>
    %cst_84 = arith.constant dense<0.000000e+00> : vector<2x8xf32>
    %178 = vector.multi_reduction <add>, %177, %cst_84 [2] : vector<2x8x8xf32> to vector<2x8xf32>
    %179 = vector.shape_cast %178 : vector<2x8xf32> to vector<2x8x1xf32>
    %180 = tpu.reciprocal %179 {approx = true} : vector<2x8x1xf32> -> vector<2x8x1xf32>
    "tpu.trace_start"() <{level = 10 : i32, message = "bqk,bkd->bqd"}> : () -> ()
    %cst_85 = arith.constant dense<0.000000e+00> : vector<2x8x32xf32>
    %181 = tpu.matmul %177, %169, %cst_85 {dimension_numbers = #tpu.dot_dimension_numbers<[2], [1], [1], [2], [0, 0, 0, 1, 1, 2], [0], [0]>} : vector<2x8x8xf32>, vector<2x8x32xf32>, vector<2x8x32xf32> -> vector<2x8x32xf32>
    "tpu.trace_stop"() : () -> ()
    %182 = vector.broadcast %180 : vector<2x8x1xf32> to vector<2x8x32xf32>
    %183 = arith.mulf %181, %182 : vector<2x8x32xf32>
    %184 = vector.shape_cast %183 : vector<2x8x32xf32> to vector<16x32xf32>
    %c1_86 = arith.constant 1 : index
    %c0_87 = arith.constant 0 : index
    %c0_88 = arith.constant 0 : index
    %185 = vector.load %arg8[%c1_86, %c0_87, %c0_88] : memref<2x32x32xf32, #tpu.memory_space<vmem>>, vector<1x32x32xf32>
    %186 = vector.shape_cast %185 : vector<1x32x32xf32> to vector<32x32xf32>
    %cst_89 = arith.constant dense<0.000000e+00> : vector<16x32xf32>
    %187 = tpu.matmul %184, %186, %cst_89 {dimension_numbers = #tpu.dot_dimension_numbers<[1], [0], [0], [1], [0, 0, 1, 1], [], []>} : vector<16x32xf32>, vector<32x32xf32>, vector<16x32xf32> -> vector<16x32xf32>
    %c1_90 = arith.constant 1 : index
    %c0_91 = arith.constant 0 : index
    %c0_92 = arith.constant 0 : index
    %188 = vector.load %arg9[%c1_90, %c0_91, %c0_92] : memref<2x1x32xf32, #tpu.memory_space<vmem>>, vector<1x1x32xf32>
    %189 = vector.shape_cast %188 : vector<1x1x32xf32> to vector<1x32xf32>
    %190 = vector.broadcast %189 : vector<1x32xf32> to vector<16x32xf32>
    %191 = arith.addf %187, %190 : vector<16x32xf32>
    %192 = arith.addf %191, %156 : vector<16x32xf32>
    %c1_93 = arith.constant 1 : index
    %c0_94 = arith.constant 0 : index
    %c0_95 = arith.constant 0 : index
    %193 = vector.load %arg10[%c1_93, %c0_94, %c0_95] : memref<2x1x32xf32, #tpu.memory_space<vmem>>, vector<1x1x32xf32>
    %194 = vector.shape_cast %193 : vector<1x1x32xf32> to vector<1x32xf32>
    %c1_96 = arith.constant 1 : index
    %c0_97 = arith.constant 0 : index
    %c0_98 = arith.constant 0 : index
    %195 = vector.load %arg11[%c1_96, %c0_97, %c0_98] : memref<2x1x32xf32, #tpu.memory_space<vmem>>, vector<1x1x32xf32>
    %196 = vector.shape_cast %195 : vector<1x1x32xf32> to vector<1x32xf32>
    %cst_99 = arith.constant dense<0.000000e+00> : vector<16xf32>
    %197 = vector.multi_reduction <add>, %192, %cst_99 [1] : vector<16x32xf32> to vector<16xf32>
    %198 = vector.shape_cast %197 : vector<16xf32> to vector<16x1xf32>
    %cst_100 = arith.constant 3.200000e+01 : f32
    %199 = vector.broadcast %cst_100 : f32 to vector<16x1xf32>
    %200 = arith.divf %198, %199 : vector<16x1xf32>
    %201 = vector.broadcast %200 : vector<16x1xf32> to vector<16x32xf32>
    %202 = arith.subf %192, %201 : vector<16x32xf32>
    %203 = arith.mulf %202, %202 : vector<16x32xf32>
    %cst_101 = arith.constant dense<0.000000e+00> : vector<16xf32>
    %204 = vector.multi_reduction <add>, %203, %cst_101 [1] : vector<16x32xf32> to vector<16xf32>
    %205 = vector.shape_cast %204 : vector<16xf32> to vector<16x1xf32>
    %cst_102 = arith.constant 3.200000e+01 : f32
    %206 = vector.broadcast %cst_102 : f32 to vector<16x1xf32>
    %207 = arith.divf %205, %206 : vector<16x1xf32>
    %208 = vector.broadcast %200 : vector<16x1xf32> to vector<16x32xf32>
    %209 = arith.subf %192, %208 : vector<16x32xf32>
    %cst_103 = arith.constant 9.99999996E-13 : f32
    %210 = vector.broadcast %cst_103 : f32 to vector<16x1xf32>
    %211 = arith.addf %207, %210 : vector<16x1xf32>
    %212 = math.rsqrt %211 : vector<16x1xf32>
    %213 = vector.broadcast %212 : vector<16x1xf32> to vector<16x32xf32>
    %214 = arith.mulf %209, %213 : vector<16x32xf32>
    %215 = vector.broadcast %194 : vector<1x32xf32> to vector<16x32xf32>
    %216 = arith.mulf %214, %215 : vector<16x32xf32>
    %217 = vector.broadcast %196 : vector<1x32xf32> to vector<16x32xf32>
    %218 = arith.addf %216, %217 : vector<16x32xf32>
    %c1_104 = arith.constant 1 : index
    %c0_105 = arith.constant 0 : index
    %c0_106 = arith.constant 0 : index
    %219 = vector.load %arg12[%c1_104, %c0_105, %c0_106] : memref<2x32x64xf32, #tpu.memory_space<vmem>>, vector<1x32x64xf32>
    %220 = vector.shape_cast %219 : vector<1x32x64xf32> to vector<32x64xf32>
    %cst_107 = arith.constant dense<0.000000e+00> : vector<16x64xf32>
    %221 = tpu.matmul %218, %220, %cst_107 {dimension_numbers = #tpu.dot_dimension_numbers<[1], [0], [0], [1], [0, 0, 1, 1], [], []>} : vector<16x32xf32>, vector<32x64xf32>, vector<16x64xf32> -> vector<16x64xf32>
    %c1_108 = arith.constant 1 : index
    %c0_109 = arith.constant 0 : index
    %c0_110 = arith.constant 0 : index
    %222 = vector.load %arg13[%c1_108, %c0_109, %c0_110] : memref<2x1x64xf32, #tpu.memory_space<vmem>>, vector<1x1x64xf32>
    %223 = vector.shape_cast %222 : vector<1x1x64xf32> to vector<1x64xf32>
    %224 = vector.broadcast %223 : vector<1x64xf32> to vector<16x64xf32>
    %225 = arith.addf %221, %224 : vector<16x64xf32>
    %cst_111 = arith.constant 5.000000e-01 : f32
    %226 = vector.broadcast %cst_111 : f32 to vector<16x64xf32>
    %227 = arith.mulf %226, %225 : vector<16x64xf32>
    %cst_112 = arith.constant 4.471500e-02 : f32
    %228 = vector.broadcast %cst_112 : f32 to vector<16x64xf32>
    %229 = arith.mulf %228, %225 : vector<16x64xf32>
    %230 = arith.mulf %229, %225 : vector<16x64xf32>
    %231 = arith.mulf %230, %225 : vector<16x64xf32>
    %232 = arith.addf %225, %231 : vector<16x64xf32>
    %cst_113 = arith.constant 0.797884583 : f32
    %233 = vector.broadcast %cst_113 : f32 to vector<16x64xf32>
    %234 = arith.mulf %233, %232 : vector<16x64xf32>
    %235 = math.tanh %234 : vector<16x64xf32>
    %cst_114 = arith.constant 1.000000e+00 : f32
    %236 = vector.broadcast %cst_114 : f32 to vector<16x64xf32>
    %237 = arith.addf %236, %235 : vector<16x64xf32>
    %238 = arith.mulf %227, %237 : vector<16x64xf32>
    %c1_115 = arith.constant 1 : index
    %c0_116 = arith.constant 0 : index
    %c0_117 = arith.constant 0 : index
    %239 = vector.load %arg14[%c1_115, %c0_116, %c0_117] : memref<2x64x32xf32, #tpu.memory_space<vmem>>, vector<1x64x32xf32>
    %240 = vector.shape_cast %239 : vector<1x64x32xf32> to vector<64x32xf32>
    %cst_118 = arith.constant dense<0.000000e+00> : vector<16x32xf32>
    %241 = tpu.matmul %238, %240, %cst_118 {dimension_numbers = #tpu.dot_dimension_numbers<[1], [0], [0], [1], [0, 0, 1, 1], [], []>} : vector<16x64xf32>, vector<64x32xf32>, vector<16x32xf32> -> vector<16x32xf32>
    %c1_119 = arith.constant 1 : index
    %c0_120 = arith.constant 0 : index
    %c0_121 = arith.constant 0 : index
    %242 = vector.load %arg15[%c1_119, %c0_120, %c0_121] : memref<2x1x32xf32, #tpu.memory_space<vmem>>, vector<1x1x32xf32>
    %243 = vector.shape_cast %242 : vector<1x1x32xf32> to vector<1x32xf32>
    %244 = vector.broadcast %243 : vector<1x32xf32> to vector<16x32xf32>
    %245 = arith.addf %241, %244 : vector<16x32xf32>
    %246 = arith.addf %245, %218 : vector<16x32xf32>
    %c1_122 = arith.constant 1 : index
    %c0_123 = arith.constant 0 : index
    %c0_124 = arith.constant 0 : index
    %247 = vector.load %arg16[%c1_122, %c0_123, %c0_124] : memref<2x1x32xf32, #tpu.memory_space<vmem>>, vector<1x1x32xf32>
    %248 = vector.shape_cast %247 : vector<1x1x32xf32> to vector<1x32xf32>
    %c1_125 = arith.constant 1 : index
    %c0_126 = arith.constant 0 : index
    %c0_127 = arith.constant 0 : index
    %249 = vector.load %arg17[%c1_125, %c0_126, %c0_127] : memref<2x1x32xf32, #tpu.memory_space<vmem>>, vector<1x1x32xf32>
    %250 = vector.shape_cast %249 : vector<1x1x32xf32> to vector<1x32xf32>
    %cst_128 = arith.constant dense<0.000000e+00> : vector<16xf32>
    %251 = vector.multi_reduction <add>, %246, %cst_128 [1] : vector<16x32xf32> to vector<16xf32>
    %252 = vector.shape_cast %251 : vector<16xf32> to vector<16x1xf32>
    %cst_129 = arith.constant 3.200000e+01 : f32
    %253 = vector.broadcast %cst_129 : f32 to vector<16x1xf32>
    %254 = arith.divf %252, %253 : vector<16x1xf32>
    %255 = vector.broadcast %254 : vector<16x1xf32> to vector<16x32xf32>
    %256 = arith.subf %246, %255 : vector<16x32xf32>
    %257 = arith.mulf %256, %256 : vector<16x32xf32>
    %cst_130 = arith.constant dense<0.000000e+00> : vector<16xf32>
    %258 = vector.multi_reduction <add>, %257, %cst_130 [1] : vector<16x32xf32> to vector<16xf32>
    %259 = vector.shape_cast %258 : vector<16xf32> to vector<16x1xf32>
    %cst_131 = arith.constant 3.200000e+01 : f32
    %260 = vector.broadcast %cst_131 : f32 to vector<16x1xf32>
    %261 = arith.divf %259, %260 : vector<16x1xf32>
    %262 = vector.broadcast %254 : vector<16x1xf32> to vector<16x32xf32>
    %263 = arith.subf %246, %262 : vector<16x32xf32>
    %cst_132 = arith.constant 9.99999996E-13 : f32
    %264 = vector.broadcast %cst_132 : f32 to vector<16x1xf32>
    %265 = arith.addf %261, %264 : vector<16x1xf32>
    %266 = math.rsqrt %265 : vector<16x1xf32>
    %267 = vector.broadcast %266 : vector<16x1xf32> to vector<16x32xf32>
    %268 = arith.mulf %263, %267 : vector<16x32xf32>
    %269 = vector.broadcast %248 : vector<1x32xf32> to vector<16x32xf32>
    %270 = arith.mulf %268, %269 : vector<16x32xf32>
    %271 = vector.broadcast %250 : vector<1x32xf32> to vector<16x32xf32>
    %272 = arith.addf %270, %271 : vector<16x32xf32>
    %273 = vector.shape_cast %272 : vector<16x32xf32> to vector<2x8x32xf32>
    %274 = vector.extract_strided_slice %273 {offsets = [0, 0, 0], sizes = [2, 1, 32], strides = [1, 1, 1]} : vector<2x8x32xf32> to vector<2x1x32xf32>
    %275 = vector.shape_cast %274 : vector<2x1x32xf32> to vector<2x32xf32>
    %c0_133 = arith.constant 0 : index
    %c0_134 = arith.constant 0 : index
    %276 = vector.load %arg18[%c0_133, %c0_134] : memref<32x32xf32, #tpu.memory_space<vmem>>, vector<32x32xf32>
    %cst_135 = arith.constant dense<0.000000e+00> : vector<2x32xf32>
    %277 = tpu.matmul %275, %276, %cst_135 {dimension_numbers = #tpu.dot_dimension_numbers<[1], [0], [0], [1], [0, 0, 1, 1], [], []>} : vector<2x32xf32>, vector<32x32xf32>, vector<2x32xf32> -> vector<2x32xf32>
    %c0_136 = arith.constant 0 : index
    %c0_137 = arith.constant 0 : index
    %278 = vector.load %arg19[%c0_136, %c0_137] : memref<1x32xf32, #tpu.memory_space<vmem>>, vector<1x32xf32>
    %279 = vector.broadcast %278 : vector<1x32xf32> to vector<2x32xf32>
    %280 = arith.addf %277, %279 : vector<2x32xf32>
    %281 = math.tanh %280 : vector<2x32xf32>
    %c0_138 = arith.constant 0 : index
    %c0_139 = arith.constant 0 : index
    %282 = vector.load %arg20[%c0_138, %c0_139] : memref<1x32xf32, #tpu.memory_space<vmem>>, vector<1x32xf32>
    "tpu.trace_start"() <{level = 10 : i32, message = "oh,bh->ob"}> : () -> ()
    %cst_140 = arith.constant dense<0.000000e+00> : vector<1x2xf32>
    %283 = tpu.matmul %282, %281, %cst_140 {dimension_numbers = #tpu.dot_dimension_numbers<[1], [1], [0], [0], [0, 0, 1, 0], [], []>} : vector<1x32xf32>, vector<2x32xf32>, vector<1x2xf32> -> vector<1x2xf32>
    "tpu.trace_stop"() : () -> ()
    %c0_141 = arith.constant 0 : index
    %c0_142 = arith.constant 0 : index
    %284 = vector.load %arg21[%c0_141, %c0_142] : memref<1x1xf32, #tpu.memory_space<vmem>>, vector<1x1xf32>
    %285 = vector.broadcast %284 : vector<1x1xf32> to vector<1x2xf32>
    %286 = arith.addf %283, %285 : vector<1x2xf32>
    %c0_143 = arith.constant 0 : index
    %c0_144 = arith.constant 0 : index
    %287 = vector.load %arg22[%c0_143, %c0_144] : memref<1x2xf32, #tpu.memory_space<vmem>>, vector<1x2xf32>
    tpu.vector_store %arg22[%c0_143, %c0_144], %286 {strides = array<i32>} : memref<1x2xf32, #tpu.memory_space<vmem>>, vector<1x2xf32>,
    return
  }
}

</mosaic_0001>

<llo_original>
// kernel: _lambda_.1
$region0: #{_lambda_.1}
  #allocation0 [shape = 'u32[]', space=smem, size = 0x4, offset = 0x4, fixed_abs, tag = 'smem constant byte address 0x4 - core index']
  #allocation1 [shape = 'u32[72,128]{1,0:T(1,128)}', space=vmem, size = 0x9000, scoped, tag = 'internal scratch']
  #allocation2 [shape = 'f32[1,1]{1,0:T(1,128)S(1)}', space=vmem, size = 0x200, scoped, tag = 'scoped memory for _lambda_.1']
  %s0 = inlined_call_operand.vmem [shape: s32[16,1], index: 0, kind: input, shape index: {}]
  %s1 = inlined_call_operand.vmem [shape: f32[2,8], index: 1, kind: input, shape index: {}]
  %s2 = inlined_call_operand.hbm [shape: f32[100,32], index: 2, kind: input, shape index: {}]
  %s3 = inlined_call_operand.vmem [shape: f32[8,32], index: 3, kind: input, shape index: {}]
  %s4 = inlined_call_operand.vmem [shape: f32[1,32], index: 4, kind: input, shape index: {}]
  %s5 = inlined_call_operand.vmem [shape: f32[1,32], index: 5, kind: input, shape index: {}, may-alias: {5,19}]
  %s6 = inlined_call_operand.hbm [shape: f32[2,32,96], index: 6, kind: input, shape index: {}]
  %s7 = inlined_call_operand.vmem [shape: f32[2,1,96], index: 7, kind: input, shape index: {}]
  %s8 = inlined_call_operand.hbm [shape: f32[2,32,32], index: 8, kind: input, shape index: {}]
  %s9 = inlined_call_operand.vmem [shape: f32[2,1,32], index: 9, kind: input, shape index: {}, may-alias: {9,11,15,17}]
  %s10 = inlined_call_operand.vmem [shape: f32[2,1,32], index: 10, kind: input, shape index: {}, may-alias: {10,16}]
  %s11 = inlined_call_operand.vmem [shape: f32[2,1,32], index: 11, kind: input, shape index: {}, may-alias: {9,11,15,17}]
  %s12 = inlined_call_operand.hbm [shape: f32[2,32,64], index: 12, kind: input, shape index: {}]
  %s13 = inlined_call_operand.vmem [shape: f32[2,1,64], index: 13, kind: input, shape index: {}]
  %s14 = inlined_call_operand.hbm [shape: f32[2,64,32], index: 14, kind: input, shape index: {}]
  %s15 = inlined_call_operand.vmem [shape: f32[2,1,32], index: 15, kind: input, shape index: {}, may-alias: {9,11,15,17}]
  %s16 = inlined_call_operand.vmem [shape: f32[2,1,32], index: 16, kind: input, shape index: {}, may-alias: {10,16}]
  %s17 = inlined_call_operand.vmem [shape: f32[2,1,32], index: 17, kind: input, shape index: {}, may-alias: {9,11,15,17}]
  %s18 = inlined_call_operand.vmem [shape: f32[32,32], index: 18, kind: input, shape index: {}]
  %s19 = inlined_call_operand.vmem [shape: f32[1,32], index: 19, kind: input, shape index: {}, may-alias: {5,19}]
  %s20 = inlined_call_operand.vmem [shape: f32[1,32], index: 20, kind: input, shape index: {}]
  %s21 = inlined_call_operand.<no memory space> [shape: f32[1,1], index: 21, kind: input, shape index: {}]
  %s22 = inlined_call_operand.hbm [shape: f32[1,2], index: 22, kind: output, shape index: {}]
  %s23 = sld [smem:[#allocation0]]
  $region118: #{_lambda_.1} parent=0
    _
  %s25 = ssub.s32 1, %s23
  %s26 = scalar_select 0, %s25, %s23
  %v27 = vstv %s21
  %28 = vst [vmem:[#allocation2] sm:$0x1] %v27
  $region1: #{_lambda_.1} parent=0
    #allocation3 [shape = 'u8[53248]{0}', space=vmem, size = 0xd000, scoped, tag = 'input window, operand 2, single buffered']
    #allocation4 [shape = 's32[1]{0}', space=sflag, size = 0x4, scoped, tag = 'scoped memory for _lambda_.1']
    #allocation5 [shape = 's32[1]{0}', space=sflag, size = 0x4, scoped, tag = 'scoped memory for _lambda_.1']
    #allocation6 [shape = 'u8[32768]{0}', space=vmem, size = 0x8000, scoped, tag = 'input window, operand 6, single buffered']
    #allocation7 [shape = 's32[1]{0}', space=sflag, size = 0x4, scoped, tag = 'scoped memory for _lambda_.1']
    #allocation8 [shape = 'u8[32768]{0}', space=vmem, size = 0x8000, scoped, tag = 'input window, operand 8, single buffered']
    #allocation9 [shape = 'u8[32768]{0}', space=vmem, size = 0x8000, scoped, tag = 'input window, operand 12, single buffered']
    #allocation10 [shape = 's32[1]{0}', space=sflag, size = 0x4, scoped, tag = 'scoped memory for _lambda_.1']
    #allocation11 [shape = 'u8[65536]{0}', space=vmem, size = 0x10000, scoped, tag = 'input window, operand 14, single buffered']
    #allocation12 [shape = 'u8[512]{0}', space=vmem, size = 0x400, scoped, tag = 'output window, operand 0, single buffered']
    %29 = vsyncpa [#allocation4], 0
    %30 = vsyncpa [#allocation7], 0
    %31 = vsyncpa [#allocation10], 0
    %32 = vsyncpa [#allocation5], 0
    // Predicated region
    $region2: #{_lambda_.1} parent=1 // pred_check
      _
    $region3: #{_lambda_.1} parent=1 // pred_check_branch
      %34 = sbr.rel (0) target = $region5
    $region4: #{_lambda_.1} parent=1 // pred_region
      _
    $region5: #{_lambda_.1} parent=1 // pred_fallthru
      _
    // Predicated region
    $region6: #{_lambda_.1} parent=1 // pred_check
      _
    $region7: #{_lambda_.1} parent=1 // pred_check_branch
      %36 = sbr.rel (0) target = $region9
    $region8: #{_lambda_.1} parent=1 // pred_region
      _
    $region9: #{_lambda_.1} parent=1 // pred_fallthru
      _
    // Predicated region
    $region10: #{_lambda_.1} parent=1 // pred_check
      _
    $region11: #{_lambda_.1} parent=1 // pred_check_branch
      %38 = sbr.rel (0) target = $region13
    $region12: #{_lambda_.1} parent=1 // pred_region
      %40 = vsyncadd [#allocation4], 0
      %s41 = sshll.u32 %s2, 4
      %s42 = int_to_ptr.hbm [resolvable:$true] %s41
      %s43 = sshll.u32 [#allocation3], 4
      %s44 = int_to_ptr.vmem [resolvable:$true] %s43
      %49 = dma.hbm_to_vmem [thread:$0]  %s42, 1664, %s44, [#allocation4], 128, 128, 8
    $region13: #{_lambda_.1} parent=1 // pred_fallthru
      _
    // Predicated region
    $region14: #{_lambda_.1} parent=1 // pred_check
      _
    $region15: #{_lambda_.1} parent=1 // pred_check_branch
      %51 = sbr.rel (0) target = $region17
    $region16: #{_lambda_.1} parent=1 // pred_region
      _
    $region17: #{_lambda_.1} parent=1 // pred_fallthru
      _
    // Predicated region
    $region18: #{_lambda_.1} parent=1 // pred_check
      _
    $region19: #{_lambda_.1} parent=1 // pred_check_branch
      %53 = sbr.rel (0) target = $region21
    $region20: #{_lambda_.1} parent=1 // pred_region
      _
    $region21: #{_lambda_.1} parent=1 // pred_fallthru
      _
    // Predicated region
    $region22: #{_lambda_.1} parent=1 // pred_check
      _
    $region23: #{_lambda_.1} parent=1 // pred_check_branch
      %55 = sbr.rel (0) target = $region25
    $region24: #{_lambda_.1} parent=1 // pred_region
      _
    $region25: #{_lambda_.1} parent=1 // pred_fallthru
      _
    // Predicated region
    $region26: #{_lambda_.1} parent=1 // pred_check
      _
    $region27: #{_lambda_.1} parent=1 // pred_check_branch
      %57 = sbr.rel (0) target = $region29
    $region28: #{_lambda_.1} parent=1 // pred_region
      %59 = vsyncadd [#allocation7], 0
      %s60 = sshll.u32 %s6, 4
      %s61 = int_to_ptr.hbm [resolvable:$true] %s60
      %s62 = sshll.u32 [#allocation6], 4
      %s63 = int_to_ptr.vmem [resolvable:$true] %s62
      %68 = dma.hbm_to_vmem [thread:$0]  %s61, 1024, %s63, [#allocation7], 128, 128, 8
    $region29: #{_lambda_.1} parent=1 // pred_fallthru
      _
    // Predicated region
    $region30: #{_lambda_.1} parent=1 // pred_check
      _
    $region31: #{_lambda_.1} parent=1 // pred_check_branch
      %70 = sbr.rel (0) target = $region33
    $region32: #{_lambda_.1} parent=1 // pred_region
      _
    $region33: #{_lambda_.1} parent=1 // pred_fallthru
      _
    // Predicated region
    $region34: #{_lambda_.1} parent=1 // pred_check
      _
    $region35: #{_lambda_.1} parent=1 // pred_check_branch
      %72 = sbr.rel (0) target = $region37
    $region36: #{_lambda_.1} parent=1 // pred_region
      %74 = vsyncadd [#allocation7], 0
      %s75 = sshll.u32 %s8, 4
      %s76 = int_to_ptr.hbm [resolvable:$true] %s75
      %s77 = sshll.u32 [#allocation8], 4
      %s78 = int_to_ptr.vmem [resolvable:$true] %s77
      %83 = dma.hbm_to_vmem [thread:$0]  %s76, 1024, %s78, [#allocation7], 128, 128, 8
    $region37: #{_lambda_.1} parent=1 // pred_fallthru
      _
    // Predicated region
    $region38: #{_lambda_.1} parent=1 // pred_check
      _
    $region39: #{_lambda_.1} parent=1 // pred_check_branch
      %85 = sbr.rel (0) target = $region41
    $region40: #{_lambda_.1} parent=1 // pred_region
      _
    $region41: #{_lambda_.1} parent=1 // pred_fallthru
      _
    // Predicated region
    $region42: #{_lambda_.1} parent=1 // pred_check
      _
    $region43: #{_lambda_.1} parent=1 // pred_check_branch
      %87 = sbr.rel (0) target = $region45
    $region44: #{_lambda_.1} parent=1 // pred_region
      _
    $region45: #{_lambda_.1} parent=1 // pred_fallthru
      _
    // Predicated region
    $region46: #{_lambda_.1} parent=1 // pred_check
      _
    $region47: #{_lambda_.1} parent=1 // pred_check_branch
      %89 = sbr.rel (0) target = $region49
    $region48: #{_lambda_.1} parent=1 // pred_region
      _
    $region49: #{_lambda_.1} parent=1 // pred_fallthru
      _
    // Predicated region
    $region50: #{_lambda_.1} parent=1 // pred_check
      _
    $region51: #{_lambda_.1} parent=1 // pred_check_branch
      %91 = sbr.rel (0) target = $region53
    $region52: #{_lambda_.1} parent=1 // pred_region
      %93 = vsyncadd [#allocation10], 0
      %s94 = sshll.u32 %s12, 4
      %s95 = int_to_ptr.hbm [resolvable:$true] %s94
      %s96 = sshll.u32 [#allocation9], 4
      %s97 = int_to_ptr.vmem [resolvable:$true] %s96
      %102 = dma.hbm_to_vmem [thread:$0]  %s95, 1024, %s97, [#allocation10], 128, 128, 8
    $region53: #{_lambda_.1} parent=1 // pred_fallthru
      _
    // Predicated region
    $region54: #{_lambda_.1} parent=1 // pred_check
      _
    $region55: #{_lambda_.1} parent=1 // pred_check_branch
      %104 = sbr.rel (0) target = $region57
    $region56: #{_lambda_.1} parent=1 // pred_region
      _
    $region57: #{_lambda_.1} parent=1 // pred_fallthru
      _
    // Predicated region
    $region58: #{_lambda_.1} parent=1 // pred_check
      _
    $region59: #{_lambda_.1} parent=1 // pred_check_branch
      %106 = sbr.rel (0) target = $region61
    $region60: #{_lambda_.1} parent=1 // pred_region
      %108 = vsyncadd [#allocation10], 0
      %s109 = sshll.u32 %s14, 4
      %s110 = int_to_ptr.hbm [resolvable:$true] %s109
      %s111 = sshll.u32 [#allocation11], 4
      %s112 = int_to_ptr.vmem [resolvable:$true] %s111
      %117 = dma.hbm_to_vmem [thread:$0]  %s110, 2048, %s112, [#allocation10], 128, 128, 8
    $region61: #{_lambda_.1} parent=1 // pred_fallthru
      _
    // Predicated region
    $region62: #{_lambda_.1} parent=1 // pred_check
      _
    $region63: #{_lambda_.1} parent=1 // pred_check_branch
      %119 = sbr.rel (0) target = $region65
    $region64: #{_lambda_.1} parent=1 // pred_region
      _
    $region65: #{_lambda_.1} parent=1 // pred_fallthru
      _
    // Predicated region
    $region66: #{_lambda_.1} parent=1 // pred_check
      _
    $region67: #{_lambda_.1} parent=1 // pred_check_branch
      %121 = sbr.rel (0) target = $region69
    $region68: #{_lambda_.1} parent=1 // pred_region
      _
    $region69: #{_lambda_.1} parent=1 // pred_fallthru
      _
    // Predicated region
    $region70: #{_lambda_.1} parent=1 // pred_check
      _
    $region71: #{_lambda_.1} parent=1 // pred_check_branch
      %123 = sbr.rel (0) target = $region73
    $region72: #{_lambda_.1} parent=1 // pred_region
      _
    $region73: #{_lambda_.1} parent=1 // pred_fallthru
      _
    // Predicated region
    $region74: #{_lambda_.1} parent=1 // pred_check
      _
    $region75: #{_lambda_.1} parent=1 // pred_check_branch
      %125 = sbr.rel (0) target = $region77
    $region76: #{_lambda_.1} parent=1 // pred_region
      _
    $region77: #{_lambda_.1} parent=1 // pred_fallthru
      _
    // Predicated region
    $region78: #{_lambda_.1} parent=1 // pred_check
      _
    $region79: #{_lambda_.1} parent=1 // pred_check_branch
      %127 = sbr.rel (0) target = $region81
    $region80: #{_lambda_.1} parent=1 // pred_region
      _
    $region81: #{_lambda_.1} parent=1 // pred_fallthru
      _
    // Predicated region
    $region82: #{_lambda_.1} parent=1 // pred_check
      _
    $region83: #{_lambda_.1} parent=1 // pred_check_branch
      %129 = sbr.rel (0) target = $region85
    $region84: #{_lambda_.1} parent=1 // pred_region
      _
    $region85: #{_lambda_.1} parent=1 // pred_fallthru
      _
    // Predicated region
    $region86: #{_lambda_.1} parent=1 // pred_check
      _
    $region87: #{_lambda_.1} parent=1 // pred_check_branch
      %131 = sbr.rel (0) target = $region89
    $region88: #{_lambda_.1} parent=1 // pred_region
      _
    $region89: #{_lambda_.1} parent=1 // pred_fallthru
      _
    // Predicated region
    $region90: #{_lambda_.1} parent=1 // pred_check
      _
    $region91: #{_lambda_.1} parent=1 // pred_check_branch
      %133 = sbr.rel (0) target = $region93
    $region92: #{_lambda_.1} parent=1 // pred_region
      %135 = dma.done [#allocation4], 1664
    $region93: #{_lambda_.1} parent=1 // pred_fallthru
      _
    // Predicated region
    $region94: #{_lambda_.1} parent=1 // pred_check
      _
    $region95: #{_lambda_.1} parent=1 // pred_check_branch
      %137 = sbr.rel (0) target = $region97
    $region96: #{_lambda_.1} parent=1 // pred_region
      %139 = dma.done [#allocation7], 1024
    $region97: #{_lambda_.1} parent=1 // pred_fallthru
      _
    // Predicated region
    $region98: #{_lambda_.1} parent=1 // pred_check
      _
    $region99: #{_lambda_.1} parent=1 // pred_check_branch
      %141 = sbr.rel (0) target = $region101
    $region100: #{_lambda_.1} parent=1 // pred_region
      %143 = dma.done [#allocation7], 1024
    $region101: #{_lambda_.1} parent=1 // pred_fallthru
      _
    // Predicated region
    $region102: #{_lambda_.1} parent=1 // pred_check
      _
    $region103: #{_lambda_.1} parent=1 // pred_check_branch
      %145 = sbr.rel (0) target = $region105
    $region104: #{_lambda_.1} parent=1 // pred_region
      %147 = dma.done [#allocation10], 1024
    $region105: #{_lambda_.1} parent=1 // pred_fallthru
      _
    // Predicated region
    $region106: #{_lambda_.1} parent=1 // pred_check
      _
    $region107: #{_lambda_.1} parent=1 // pred_check_branch
      %149 = sbr.rel (0) target = $region109
    $region108: #{_lambda_.1} parent=1 // pred_region
      %151 = dma.done [#allocation10], 2048
    $region109: #{_lambda_.1} parent=1 // pred_fallthru
      _
    %v152 = vld [vmem:[%s0] sm:$0xff]
    %v153 = vld [vmem:[%s0 + $0x8] sm:$0xff]
    %v154 = vlaneseq
    %v155 = vand.u32 %v154, 127
    %156 = vset.pattern.permute.xlu0 0
    %157 = vperm.xlu0 %156, %v152
    %v158 = vpop.permute.xlu0 %157
    %159 = vset.pattern.permute.xlu0 0
    %160 = vperm.xlu0 %159, %v153
    %v161 = vpop.permute.xlu0 %160
    %vm162 = vcmp.eq.s32.totalorder %v158, %v155
    %vm163 = vcmp.eq.s32.totalorder %v161, %v155
    %v164 = vsel %vm162, 1, 0
    %v165 = vsel %vm163, 1, 0
    %v166 = vcvt.s32.f32 %v164
    %v167 = vcvt.s32.f32 %v165
    %v168 = vld [vmem:[#allocation3] sm:$0xff]
    %v169 = vld [vmem:[#allocation3 + $0x8] sm:$0xff]
    %v170 = vld [vmem:[#allocation3 + $0x10] sm:$0xff]
    %v171 = vld [vmem:[#allocation3 + $0x18] sm:$0xff]
    %v172 = vld [vmem:[#allocation3 + $0x20] sm:$0xff]
    %v173 = vld [vmem:[#allocation3 + $0x28] sm:$0xff]
    %v174 = vld [vmem:[#allocation3 + $0x30] sm:$0xff]
    %v175 = vld [vmem:[#allocation3 + $0x38] sm:$0xff]
    %v176 = vld [vmem:[#allocation3 + $0x40] sm:$0xff]
    %v177 = vld [vmem:[#allocation3 + $0x48] sm:$0xff]
    %v178 = vld [vmem:[#allocation3 + $0x50] sm:$0xff]
    %v179 = vld [vmem:[#allocation3 + $0x58] sm:$0xff]
    %v180 = vld [vmem:[#allocation3 + $0x60] sm:$0xf]
    %v181 = vld [vmem:[%s3] sm:$0xff]
    %vm182 = vcmask 818176
    %v184 = vsel %vm182, %v166, 0
    %v187 = vsel %vm182, %v167, 0
    %vm189 = vcmask 1043456
    %v191 = vsel %vm189, %v180, 0
    %193 = vmatpush.msra.mxu0 0.0
    %194 = vmatpush.msra.mxu0 0.0
    %195 = vmatpush.msra.mxu0 0.0
    %196 = vmatpush.msra.mxu0 %v191
    %197 = vmatpush.msra.mxu0 %v179
    %198 = vmatpush.msra.mxu0 %v178
    %199 = vmatpush.msra.mxu0 %v177
    %200 = vmatpush.msra.mxu0 %v176
    %201 = vmatpush.msra.mxu0 %v175
    %202 = vmatpush.msra.mxu0 %v174
    %203 = vmatpush.msra.mxu0 %v173
    %204 = vmatpush.msra.mxu0 %v172
    %205 = vmatpush.msra.mxu0 %v171
    %206 = vmatpush.msra.mxu0 %v170
    %207 = vmatpush.msra.mxu0 %v169
    %208 = vmatpush.msra.mxu0 %v168
    %209 = vmatmul.f32.gmra.mxu0 %v184
    %v210 = vpop.f32.mrf.mxu0
    %v211 = vadd.f32 %v181, %v210
    %212 = vmatmul.f32.gmra.mxu0 %v187
    %v213 = vpop.f32.mrf.mxu0
    %v214 = vadd.f32 %v181, %v213
    %215 = vdwg.mxu0
    %v216 = vld [vmem:[%s4] sm:$0x1]
    %v217 = vld [vmem:[%s5] sm:$0x1]
    %vm218 = vcmask 261120
    %v219 = vsel %vm218, %v211, 0.0
    %220 = vadd.xlane.f32.xlu0 %v219
    %v221 = vpop.xlane.xlu0 %220
    %v222 = vsel %vm218, %v214, 0.0
    %223 = vadd.xlane.f32.xlu0 %v222
    %v224 = vpop.xlane.xlu0 %223
    %v225 = vrcp.pop 32.0
    %v226 = vmul.f32 32.0, %v225
    %v227 = vsub.f32 1.0, %v226
    %v228 = vmul.f32 %v225, %v227
    %v229 = vadd.f32 %v225, %v228
    %vm230 = vweird.f32 %v225
    %v231 = vsel %vm230, %v225, %v229
    %v232 = vmul.f32 %v221, %v231
    %v233 = vmul.f32 %v224, %v231
    %v234 = vsub.f32 %v211, %v232
    %v235 = vsub.f32 %v214, %v233
    %v236 = vmul.f32 %v234, %v234
    %v237 = vmul.f32 %v235, %v235
    %v238 = vsel %vm218, %v236, 0.0
    %239 = vadd.xlane.f32.xlu0 %v238
    %v240 = vpop.xlane.xlu0 %239
    %v241 = vsel %vm218, %v237, 0.0
    %242 = vadd.xlane.f32.xlu0 %v241
    %v243 = vpop.xlane.xlu0 %242
    %v244 = vmul.f32 %v240, %v231
    %v245 = vmul.f32 %v243, %v231
    %v246 = vadd.f32 %v244, 1e-12
    %v247 = vadd.f32 %v245, 1e-12
    %v248 = vrsqrt.pop %v246
    %v249 = vmul.f32 %v248, %v246
    %v250 = vmul.f32 %v249, %v248
    %v251 = vmul.f32 0.5, %v250
    %v252 = vsub.f32 1.5, %v251
    %v253 = vmul.f32 %v248, %v252
    %vm254 = vweird.f32 %v246
    %vm255 = vweird.f32 %v248
    %vm256 = vmor %vm254, %vm255
    %v257 = vsel %vm256, %v248, %v253
    %v258 = vrsqrt.pop %v247
    %v259 = vmul.f32 %v258, %v247
    %v260 = vmul.f32 %v259, %v258
    %v261 = vmul.f32 0.5, %v260
    %v262 = vsub.f32 1.5, %v261
    %v263 = vmul.f32 %v258, %v262
    %vm264 = vweird.f32 %v247
    %vm265 = vweird.f32 %v258
    %vm266 = vmor %vm264, %vm265
    %v267 = vsel %vm266, %v258, %v263
    %v268 = vmul.f32 %v234, %v257
    %v269 = vmul.f32 %v235, %v267
    %v271 = vperm.slane %v216, 0
    %v273 = vmul.f32 %v268, %v271
    %v274 = vmul.f32 %v269, %v271
    %v276 = vperm.slane %v217, 0
    %v278 = vadd.f32 %v273, %v276
    %v279 = vadd.f32 %v274, %v276
    %v280 = vld [vmem:[%s1] sm:$0x3]
    %v281 = vsub.f32 1.0, %v280
    %v282 = vmul.f32 %v281, -10000.0
    %v284 = vrot.slane %v282, 1
    %v285 = vld [vmem:[#allocation6] sm:$0xff]
    %v286 = vld [vmem:[#allocation6 + $0x8] sm:$0xff]
    %v287 = vld [vmem:[#allocation6 + $0x10] sm:$0xff]
    %v288 = vld [vmem:[#allocation6 + $0x18] sm:$0xff]
    %v289 = vld [vmem:[%s7] sm:$0x1]
    %v291 = vperm.slane %v289, 0
    %v294 = vsel %vm218, %v278, 0
    %v297 = vsel %vm218, %v279, 0
    %299 = vmatpush.msra.mxu0 0.0
    %300 = vmatpush.msra.mxu0 0.0
    %301 = vmatpush.msra.mxu0 0.0
    %302 = vmatpush.msra.mxu0 0.0
    %303 = vmatpush.msra.mxu0 0.0
    %304 = vmatpush.msra.mxu0 0.0
    %305 = vmatpush.msra.mxu0 0.0
    %306 = vmatpush.msra.mxu0 0.0
    %307 = vmatpush.msra.mxu0 0.0
    %308 = vmatpush.msra.mxu0 0.0
    %309 = vmatpush.msra.mxu0 0.0
    %310 = vmatpush.msra.mxu0 0.0
    %311 = vmatpush.msra.mxu0 %v288
    %312 = vmatpush.msra.mxu0 %v287
    %313 = vmatpush.msra.mxu0 %v286
    %314 = vmatpush.msra.mxu0 %v285
    %315 = vmatmul.f32.gmra.mxu0 %v294
    %v316 = vpop.f32.mrf.mxu0
    %v317 = vadd.f32 %v291, %v316
    %318 = vmatmul.f32.gmra.mxu0 %v297
    %v319 = vpop.f32.mrf.mxu0
    %v320 = vadd.f32 %v291, %v319
    %321 = vdwg.mxu0
    %v322 = vperm.slane %v282, 0
    %v323 = vperm.slane %v284, 0
    %327 = vrot.lane.b32.xlu0 %v317, 96
    %v328 = vpop.permute.xlu0 %327
    %v329 = vsel %vm218, %v317, 0
    %v331 = vsel %vm218, %v328, 0
    %333 = vmatpush.xpose.msra.mxu0 0.0
    %334 = vmatpush.xpose.msra.mxu0 0.0
    %335 = vmatpush.xpose.msra.mxu0 0.0
    %336 = vmatpush.xpose.msra.mxu0 0.0
    %337 = vmatpush.xpose.msra.mxu0 0.0
    %338 = vmatpush.xpose.msra.mxu0 0.0
    %339 = vmatpush.xpose.msra.mxu0 0.0
    %340 = vmatpush.xpose.msra.mxu0 0.0
    %341 = vmatpush.xpose.msra.mxu0 0.0
    %342 = vmatpush.xpose.msra.mxu0 0.0
    %343 = vmatpush.xpose.msra.mxu0 0.0
    %344 = vmatpush.xpose.msra.mxu0 0.0
    %345 = vmatpush.xpose.msra.mxu0 0.0
    %346 = vmatpush.xpose.msra.mxu0 0.0
    %347 = vmatpush.xpose.msra.mxu0 0.0
    %348 = vmatpush.xpose.msra.mxu0 %v331
    %349 = vmatmul.f32.gmra.mxu0 %v329
    %v350 = vpop.f32.mrf.mxu0
    %v351 = vadd.f32 %v322, %v350
    %352 = vdwg.mxu0
    %354 = vrot.lane.b32.xlu0 %v320, 96
    %v355 = vpop.permute.xlu0 %354
    %v356 = vsel %vm218, %v320, 0
    %v358 = vsel %vm218, %v355, 0
    %360 = vmatpush.xpose.msra.mxu0 0.0
    %361 = vmatpush.xpose.msra.mxu0 0.0
    %362 = vmatpush.xpose.msra.mxu0 0.0
    %363 = vmatpush.xpose.msra.mxu0 0.0
    %364 = vmatpush.xpose.msra.mxu0 0.0
    %365 = vmatpush.xpose.msra.mxu0 0.0
    %366 = vmatpush.xpose.msra.mxu0 0.0
    %367 = vmatpush.xpose.msra.mxu0 0.0
    %368 = vmatpush.xpose.msra.mxu0 0.0
    %369 = vmatpush.xpose.msra.mxu0 0.0
    %370 = vmatpush.xpose.msra.mxu0 0.0
    %371 = vmatpush.xpose.msra.mxu0 0.0
    %372 = vmatpush.xpose.msra.mxu0 0.0
    %373 = vmatpush.xpose.msra.mxu0 0.0
    %374 = vmatpush.xpose.msra.mxu0 0.0
    %375 = vmatpush.xpose.msra.mxu0 %v358
    %376 = vmatmul.f32.gmra.mxu0 %v356
    %v377 = vpop.f32.mrf.mxu0
    %v378 = vadd.f32 %v323, %v377
    %379 = vdwg.mxu0
    %vm380 = vcmask 64512
    %v381 = vsel %vm380, %v351, -inf
    %382 = vmax.xlane.f32.xlu0 %v381
    %v383 = vpop.xlane.xlu0 %382
    %v384 = vsel %vm380, %v378, -inf
    %385 = vmax.xlane.f32.xlu0 %v384
    %v386 = vpop.xlane.xlu0 %385
    %v387 = vsub.f32 %v351, %v383
    %v388 = vsub.f32 %v378, %v386
    %v389 = vmul.f32 %v387, 1.442695
    %v390 = vpow.pop %v389
    %v391 = vmul.f32 %v388, 1.442695
    %v392 = vpow.pop %v391
    %v393 = vsel %vm380, %v390, 0.0
    %394 = vadd.xlane.f32.xlu0 %v393
    %v395 = vpop.xlane.xlu0 %394
    %v396 = vsel %vm380, %v392, 0.0
    %397 = vadd.xlane.f32.xlu0 %v396
    %v398 = vpop.xlane.xlu0 %397
    %v399 = vrcp.pop %v395
    %v400 = vrcp.pop %v398
    %401 = vrot.lane.b32.xlu0 %v317, 64
    %v402 = vpop.permute.xlu0 %401
    %v405 = vsel %vm380, %v390, 0
    %407 = vmatpush.msra.mxu0 0.0
    %408 = vmatpush.msra.mxu0 0.0
    %409 = vmatpush.msra.mxu0 0.0
    %410 = vmatpush.msra.mxu0 0.0
    %411 = vmatpush.msra.mxu0 0.0
    %412 = vmatpush.msra.mxu0 0.0
    %413 = vmatpush.msra.mxu0 0.0
    %414 = vmatpush.msra.mxu0 0.0
    %415 = vmatpush.msra.mxu0 0.0
    %416 = vmatpush.msra.mxu0 0.0
    %417 = vmatpush.msra.mxu0 0.0
    %418 = vmatpush.msra.mxu0 0.0
    %419 = vmatpush.msra.mxu0 0.0
    %420 = vmatpush.msra.mxu0 0.0
    %421 = vmatpush.msra.mxu0 0.0
    %422 = vmatpush.msra.mxu0 %v402
    %423 = vmatmul.f32.gmra.mxu0 %v405
    %v424 = vpop.f32.mrf.mxu0
    %v425 = vadd.f32 0.0, %v424
    %426 = vdwg.mxu0
    %427 = vrot.lane.b32.xlu0 %v320, 64
    %v428 = vpop.permute.xlu0 %427
    %v431 = vsel %vm380, %v392, 0
    %433 = vmatpush.msra.mxu0 0.0
    %434 = vmatpush.msra.mxu0 0.0
    %435 = vmatpush.msra.mxu0 0.0
    %436 = vmatpush.msra.mxu0 0.0
    %437 = vmatpush.msra.mxu0 0.0
    %438 = vmatpush.msra.mxu0 0.0
    %439 = vmatpush.msra.mxu0 0.0
    %440 = vmatpush.msra.mxu0 0.0
    %441 = vmatpush.msra.mxu0 0.0
    %442 = vmatpush.msra.mxu0 0.0
    %443 = vmatpush.msra.mxu0 0.0
    %444 = vmatpush.msra.mxu0 0.0
    %445 = vmatpush.msra.mxu0 0.0
    %446 = vmatpush.msra.mxu0 0.0
    %447 = vmatpush.msra.mxu0 0.0
    %448 = vmatpush.msra.mxu0 %v428
    %449 = vmatmul.f32.gmra.mxu0 %v431
    %v450 = vpop.f32.mrf.mxu0
    %v451 = vadd.f32 0.0, %v450
    %452 = vdwg.mxu0
    %v453 = vmul.f32 %v425, %v399
    %v454 = vmul.f32 %v451, %v400
    %v455 = vld [vmem:[#allocation8] sm:$0xff]
    %v456 = vld [vmem:[#allocation8 + $0x8] sm:$0xff]
    %v457 = vld [vmem:[#allocation8 + $0x10] sm:$0xff]
    %v458 = vld [vmem:[#allocation8 + $0x18] sm:$0xff]
    %v459 = vld [vmem:[%s9] sm:$0x1]
    %v461 = vperm.slane %v459, 0
    %v464 = vsel %vm218, %v453, 0
    %v467 = vsel %vm218, %v454, 0
    %469 = vmatpush.msra.mxu0 0.0
    %470 = vmatpush.msra.mxu0 0.0
    %471 = vmatpush.msra.mxu0 0.0
    %472 = vmatpush.msra.mxu0 0.0
    %473 = vmatpush.msra.mxu0 0.0
    %474 = vmatpush.msra.mxu0 0.0
    %475 = vmatpush.msra.mxu0 0.0
    %476 = vmatpush.msra.mxu0 0.0
    %477 = vmatpush.msra.mxu0 0.0
    %478 = vmatpush.msra.mxu0 0.0
    %479 = vmatpush.msra.mxu0 0.0
    %480 = vmatpush.msra.mxu0 0.0
    %481 = vmatpush.msra.mxu0 %v458
    %482 = vmatpush.msra.mxu0 %v457
    %483 = vmatpush.msra.mxu0 %v456
    %484 = vmatpush.msra.mxu0 %v455
    %485 = vmatmul.f32.gmra.mxu0 %v464
    %v486 = vpop.f32.mrf.mxu0
    %v487 = vadd.f32 %v461, %v486
    %488 = vmatmul.f32.gmra.mxu0 %v467
    %v489 = vpop.f32.mrf.mxu0
    %v490 = vadd.f32 %v461, %v489
    %491 = vdwg.mxu0
    %v492 = vadd.f32 %v487, %v278
    %v493 = vadd.f32 %v490, %v279
    %v494 = vld [vmem:[%s10] sm:$0x1]
    %v495 = vld [vmem:[%s11] sm:$0x1]
    %v496 = vsel %vm218, %v492, 0.0
    %497 = vadd.xlane.f32.xlu0 %v496
    %v498 = vpop.xlane.xlu0 %497
    %v499 = vsel %vm218, %v493, 0.0
    %500 = vadd.xlane.f32.xlu0 %v499
    %v501 = vpop.xlane.xlu0 %500
    %v502 = vmul.f32 %v498, %v231
    %v503 = vmul.f32 %v501, %v231
    %v504 = vsub.f32 %v492, %v502
    %v505 = vsub.f32 %v493, %v503
    %v506 = vmul.f32 %v504, %v504
    %v507 = vmul.f32 %v505, %v505
    %v508 = vsel %vm218, %v506, 0.0
    %509 = vadd.xlane.f32.xlu0 %v508
    %v510 = vpop.xlane.xlu0 %509
    %v511 = vsel %vm218, %v507, 0.0
    %512 = vadd.xlane.f32.xlu0 %v511
    %v513 = vpop.xlane.xlu0 %512
    %v514 = vmul.f32 %v510, %v231
    %v515 = vmul.f32 %v513, %v231
    %v516 = vadd.f32 %v514, 1e-12
    %v517 = vadd.f32 %v515, 1e-12
    %v518 = vrsqrt.pop %v516
    %v519 = vmul.f32 %v518, %v516
    %v520 = vmul.f32 %v519, %v518
    %v521 = vmul.f32 0.5, %v520
    %v522 = vsub.f32 1.5, %v521
    %v523 = vmul.f32 %v518, %v522
    %vm524 = vweird.f32 %v516
    %vm525 = vweird.f32 %v518
    %vm526 = vmor %vm524, %vm525
    %v527 = vsel %vm526, %v518, %v523
    %v528 = vrsqrt.pop %v517
    %v529 = vmul.f32 %v528, %v517
    %v530 = vmul.f32 %v529, %v528
    %v531 = vmul.f32 0.5, %v530
    %v532 = vsub.f32 1.5, %v531
    %v533 = vmul.f32 %v528, %v532
    %vm534 = vweird.f32 %v517
    %vm535 = vweird.f32 %v528
    %vm536 = vmor %vm534, %vm535
    %v537 = vsel %vm536, %v528, %v533
    %v538 = vmul.f32 %v504, %v527
    %v539 = vmul.f32 %v505, %v537
    %v541 = vperm.slane %v494, 0
    %v543 = vmul.f32 %v538, %v541
    %v544 = vmul.f32 %v539, %v541
    %v546 = vperm.slane %v495, 0
    %v548 = vadd.f32 %v543, %v546
    %v549 = vadd.f32 %v544, %v546
    %v550 = vld [vmem:[#allocation9] sm:$0xff]
    %v551 = vld [vmem:[#allocation9 + $0x8] sm:$0xff]
    %v552 = vld [vmem:[#allocation9 + $0x10] sm:$0xff]
    %v553 = vld [vmem:[#allocation9 + $0x18] sm:$0xff]
    %v554 = vld [vmem:[%s13] sm:$0x1]
    %v556 = vperm.slane %v554, 0
    %v559 = vsel %vm218, %v548, 0
    %v562 = vsel %vm218, %v549, 0
    %564 = vmatpush.msra.mxu0 0.0
    %565 = vmatpush.msra.mxu0 0.0
    %566 = vmatpush.msra.mxu0 0.0
    %567 = vmatpush.msra.mxu0 0.0
    %568 = vmatpush.msra.mxu0 0.0
    %569 = vmatpush.msra.mxu0 0.0
    %570 = vmatpush.msra.mxu0 0.0
    %571 = vmatpush.msra.mxu0 0.0
    %572 = vmatpush.msra.mxu0 0.0
    %573 = vmatpush.msra.mxu0 0.0
    %574 = vmatpush.msra.mxu0 0.0
    %575 = vmatpush.msra.mxu0 0.0
    %576 = vmatpush.msra.mxu0 %v553
    %577 = vmatpush.msra.mxu0 %v552
    %578 = vmatpush.msra.mxu0 %v551
    %579 = vmatpush.msra.mxu0 %v550
    %580 = vmatmul.f32.gmra.mxu0 %v559
    %v581 = vpop.f32.mrf.mxu0
    %v582 = vadd.f32 %v556, %v581
    %583 = vmatmul.f32.gmra.mxu0 %v562
    %v584 = vpop.f32.mrf.mxu0
    %v585 = vadd.f32 %v556, %v584
    %586 = vdwg.mxu0
    %v587 = vmul.f32 %v582, 0.5
    %v588 = vmul.f32 %v585, 0.5
    %v589 = vmul.f32 %v582, 0.044715
    %v590 = vmul.f32 %v585, 0.044715
    %v591 = vmul.f32 %v589, %v582
    %v592 = vmul.f32 %v590, %v585
    %v593 = vmul.f32 %v591, %v582
    %v594 = vmul.f32 %v592, %v585
    %v595 = vadd.f32 %v582, %v593
    %v596 = vadd.f32 %v585, %v594
    %v597 = vmul.f32 %v595, 0.7978846
    %v598 = vmul.f32 %v596, 0.7978846
    %v599 = vtanh.pop %v597
    %v600 = vtanh.pop %v598
    %v601 = vadd.f32 %v599, 1.0
    %v602 = vadd.f32 %v600, 1.0
    %v603 = vmul.f32 %v587, %v601
    %v604 = vmul.f32 %v588, %v602
    %v605 = vld [vmem:[#allocation11] sm:$0xff]
    %v606 = vld [vmem:[#allocation11 + $0x8] sm:$0xff]
    %v607 = vld [vmem:[#allocation11 + $0x10] sm:$0xff]
    %v608 = vld [vmem:[#allocation11 + $0x18] sm:$0xff]
    %v609 = vld [vmem:[#allocation11 + $0x20] sm:$0xff]
    %v610 = vld [vmem:[#allocation11 + $0x28] sm:$0xff]
    %v611 = vld [vmem:[#allocation11 + $0x30] sm:$0xff]
    %v612 = vld [vmem:[#allocation11 + $0x38] sm:$0xff]
    %v613 = vld [vmem:[%s15] sm:$0x1]
    %v615 = vperm.slane %v613, 0
    %vm617 = vcmask 523264
    %v619 = vsel %vm617, %v603, 0
    %v622 = vsel %vm617, %v604, 0
    %624 = vmatpush.msra.mxu0 0.0
    %625 = vmatpush.msra.mxu0 0.0
    %626 = vmatpush.msra.mxu0 0.0
    %627 = vmatpush.msra.mxu0 0.0
    %628 = vmatpush.msra.mxu0 0.0
    %629 = vmatpush.msra.mxu0 0.0
    %630 = vmatpush.msra.mxu0 0.0
    %631 = vmatpush.msra.mxu0 0.0
    %632 = vmatpush.msra.mxu0 %v612
    %633 = vmatpush.msra.mxu0 %v611
    %634 = vmatpush.msra.mxu0 %v610
    %635 = vmatpush.msra.mxu0 %v609
    %636 = vmatpush.msra.mxu0 %v608
    %637 = vmatpush.msra.mxu0 %v607
    %638 = vmatpush.msra.mxu0 %v606
    %639 = vmatpush.msra.mxu0 %v605
    %640 = vmatmul.f32.gmra.mxu0 %v619
    %v641 = vpop.f32.mrf.mxu0
    %v642 = vadd.f32 %v615, %v641
    %643 = vmatmul.f32.gmra.mxu0 %v622
    %v644 = vpop.f32.mrf.mxu0
    %v645 = vadd.f32 %v615, %v644
    %646 = vdwg.mxu0
    %v647 = vadd.f32 %v642, %v548
    %v648 = vadd.f32 %v645, %v549
    %v649 = vld [vmem:[%s16] sm:$0x1]
    %v650 = vld [vmem:[%s17] sm:$0x1]
    %v651 = vsel %vm218, %v647, 0.0
    %652 = vadd.xlane.f32.xlu0 %v651
    %v653 = vpop.xlane.xlu0 %652
    %v654 = vsel %vm218, %v648, 0.0
    %655 = vadd.xlane.f32.xlu0 %v654
    %v656 = vpop.xlane.xlu0 %655
    %v657 = vmul.f32 %v653, %v231
    %v658 = vmul.f32 %v656, %v231
    %v659 = vsub.f32 %v647, %v657
    %v660 = vsub.f32 %v648, %v658
    %v661 = vmul.f32 %v659, %v659
    %v662 = vmul.f32 %v660, %v660
    %v663 = vsel %vm218, %v661, 0.0
    %664 = vadd.xlane.f32.xlu0 %v663
    %v665 = vpop.xlane.xlu0 %664
    %v666 = vsel %vm218, %v662, 0.0
    %667 = vadd.xlane.f32.xlu0 %v666
    %v668 = vpop.xlane.xlu0 %667
    %v669 = vmul.f32 %v665, %v231
    %v670 = vmul.f32 %v668, %v231
    %v671 = vadd.f32 %v669, 1e-12
    %v672 = vadd.f32 %v670, 1e-12
    %v673 = vrsqrt.pop %v671
    %v674 = vmul.f32 %v673, %v671
    %v675 = vmul.f32 %v674, %v673
    %v676 = vmul.f32 0.5, %v675
    %v677 = vsub.f32 1.5, %v676
    %v678 = vmul.f32 %v673, %v677
    %vm679 = vweird.f32 %v671
    %vm680 = vweird.f32 %v673
    %vm681 = vmor %vm679, %vm680
    %v682 = vsel %vm681, %v673, %v678
    %v683 = vrsqrt.pop %v672
    %v684 = vmul.f32 %v683, %v672
    %v685 = vmul.f32 %v684, %v683
    %v686 = vmul.f32 0.5, %v685
    %v687 = vsub.f32 1.5, %v686
    %v688 = vmul.f32 %v683, %v687
    %vm689 = vweird.f32 %v672
    %vm690 = vweird.f32 %v683
    %vm691 = vmor %vm689, %vm690
    %v692 = vsel %vm691, %v683, %v688
    %v693 = vmul.f32 %v659, %v682
    %v694 = vmul.f32 %v660, %v692
    %v696 = vperm.slane %v649, 0
    %v698 = vmul.f32 %v693, %v696
    %v699 = vmul.f32 %v694, %v696
    %v701 = vperm.slane %v650, 0
    %v703 = vadd.f32 %v698, %v701
    %v704 = vadd.f32 %v699, %v701
    %s705 = scalar_lea.vmem [#allocation6], 32
    %v706 = vld [vmem:[%s705] sm:$0xff]
    %v707 = vld [vmem:[%s705 + $0x8] sm:$0xff]
    %v708 = vld [vmem:[%s705 + $0x10] sm:$0xff]
    %v709 = vld [vmem:[%s705 + $0x18] sm:$0xff]
    %s710 = scalar_lea.vmem %s7, 1
    %v711 = vld [vmem:[%s710] sm:$0x1]
    %v713 = vperm.slane %v711, 0
    %v716 = vsel %vm218, %v703, 0
    %v719 = vsel %vm218, %v704, 0
    %721 = vmatpush.msra.mxu0 0.0
    %722 = vmatpush.msra.mxu0 0.0
    %723 = vmatpush.msra.mxu0 0.0
    %724 = vmatpush.msra.mxu0 0.0
    %725 = vmatpush.msra.mxu0 0.0
    %726 = vmatpush.msra.mxu0 0.0
    %727 = vmatpush.msra.mxu0 0.0
    %728 = vmatpush.msra.mxu0 0.0
    %729 = vmatpush.msra.mxu0 0.0
    %730 = vmatpush.msra.mxu0 0.0
    %731 = vmatpush.msra.mxu0 0.0
    %732 = vmatpush.msra.mxu0 0.0
    %733 = vmatpush.msra.mxu0 %v709
    %734 = vmatpush.msra.mxu0 %v708
    %735 = vmatpush.msra.mxu0 %v707
    %736 = vmatpush.msra.mxu0 %v706
    %737 = vmatmul.f32.gmra.mxu0 %v716
    %v738 = vpop.f32.mrf.mxu0
    %v739 = vadd.f32 %v713, %v738
    %740 = vmatmul.f32.gmra.mxu0 %v719
    %v741 = vpop.f32.mrf.mxu0
    %v742 = vadd.f32 %v713, %v741
    %743 = vdwg.mxu0
    %745 = vrot.lane.b32.xlu0 %v739, 96
    %v746 = vpop.permute.xlu0 %745
    %v747 = vsel %vm218, %v739, 0
    %v749 = vsel %vm218, %v746, 0
    %751 = vmatpush.xpose.msra.mxu0 0.0
    %752 = vmatpush.xpose.msra.mxu0 0.0
    %753 = vmatpush.xpose.msra.mxu0 0.0
    %754 = vmatpush.xpose.msra.mxu0 0.0
    %755 = vmatpush.xpose.msra.mxu0 0.0
    %756 = vmatpush.xpose.msra.mxu0 0.0
    %757 = vmatpush.xpose.msra.mxu0 0.0
    %758 = vmatpush.xpose.msra.mxu0 0.0
    %759 = vmatpush.xpose.msra.mxu0 0.0
    %760 = vmatpush.xpose.msra.mxu0 0.0
    %761 = vmatpush.xpose.msra.mxu0 0.0
    %762 = vmatpush.xpose.msra.mxu0 0.0
    %763 = vmatpush.xpose.msra.mxu0 0.0
    %764 = vmatpush.xpose.msra.mxu0 0.0
    %765 = vmatpush.xpose.msra.mxu0 0.0
    %766 = vmatpush.xpose.msra.mxu0 %v749
    %767 = vmatmul.f32.gmra.mxu0 %v747
    %v768 = vpop.f32.mrf.mxu0
    %v769 = vadd.f32 %v322, %v768
    %770 = vdwg.mxu0
    %772 = vrot.lane.b32.xlu0 %v742, 96
    %v773 = vpop.permute.xlu0 %772
    %v774 = vsel %vm218, %v742, 0
    %v776 = vsel %vm218, %v773, 0
    %778 = vmatpush.xpose.msra.mxu0 0.0
    %779 = vmatpush.xpose.msra.mxu0 0.0
    %780 = vmatpush.xpose.msra.mxu0 0.0
    %781 = vmatpush.xpose.msra.mxu0 0.0
    %782 = vmatpush.xpose.msra.mxu0 0.0
    %783 = vmatpush.xpose.msra.mxu0 0.0
    %784 = vmatpush.xpose.msra.mxu0 0.0
    %785 = vmatpush.xpose.msra.mxu0 0.0
    %786 = vmatpush.xpose.msra.mxu0 0.0
    %787 = vmatpush.xpose.msra.mxu0 0.0
    %788 = vmatpush.xpose.msra.mxu0 0.0
    %789 = vmatpush.xpose.msra.mxu0 0.0
    %790 = vmatpush.xpose.msra.mxu0 0.0
    %791 = vmatpush.xpose.msra.mxu0 0.0
    %792 = vmatpush.xpose.msra.mxu0 0.0
    %793 = vmatpush.xpose.msra.mxu0 %v776
    %794 = vmatmul.f32.gmra.mxu0 %v774
    %v795 = vpop.f32.mrf.mxu0
    %v796 = vadd.f32 %v323, %v795
    %797 = vdwg.mxu0
    %v798 = vsel %vm380, %v769, -inf
    %799 = vmax.xlane.f32.xlu0 %v798
    %v800 = vpop.xlane.xlu0 %799
    %v801 = vsel %vm380, %v796, -inf
    %802 = vmax.xlane.f32.xlu0 %v801
    %v803 = vpop.xlane.xlu0 %802
    %v804 = vsub.f32 %v769, %v800
    %v805 = vsub.f32 %v796, %v803
    %v806 = vmul.f32 %v804, 1.442695
    %v807 = vpow.pop %v806
    %v808 = vmul.f32 %v805, 1.442695
    %v809 = vpow.pop %v808
    %v810 = vsel %vm380, %v807, 0.0
    %811 = vadd.xlane.f32.xlu0 %v810
    %v812 = vpop.xlane.xlu0 %811
    %v813 = vsel %vm380, %v809, 0.0
    %814 = vadd.xlane.f32.xlu0 %v813
    %v815 = vpop.xlane.xlu0 %814
    %v816 = vrcp.pop %v812
    %v817 = vrcp.pop %v815
    %818 = vrot.lane.b32.xlu0 %v739, 64
    %v819 = vpop.permute.xlu0 %818
    %v822 = vsel %vm380, %v807, 0
    %824 = vmatpush.msra.mxu0 0.0
    %825 = vmatpush.msra.mxu0 0.0
    %826 = vmatpush.msra.mxu0 0.0
    %827 = vmatpush.msra.mxu0 0.0
    %828 = vmatpush.msra.mxu0 0.0
    %829 = vmatpush.msra.mxu0 0.0
    %830 = vmatpush.msra.mxu0 0.0
    %831 = vmatpush.msra.mxu0 0.0
    %832 = vmatpush.msra.mxu0 0.0
    %833 = vmatpush.msra.mxu0 0.0
    %834 = vmatpush.msra.mxu0 0.0
    %835 = vmatpush.msra.mxu0 0.0
    %836 = vmatpush.msra.mxu0 0.0
    %837 = vmatpush.msra.mxu0 0.0
    %838 = vmatpush.msra.mxu0 0.0
    %839 = vmatpush.msra.mxu0 %v819
    %840 = vmatmul.f32.gmra.mxu0 %v822
    %v841 = vpop.f32.mrf.mxu0
    %v842 = vadd.f32 0.0, %v841
    %843 = vdwg.mxu0
    %844 = vrot.lane.b32.xlu0 %v742, 64
    %v845 = vpop.permute.xlu0 %844
    %v848 = vsel %vm380, %v809, 0
    %850 = vmatpush.msra.mxu0 0.0
    %851 = vmatpush.msra.mxu0 0.0
    %852 = vmatpush.msra.mxu0 0.0
    %853 = vmatpush.msra.mxu0 0.0
    %854 = vmatpush.msra.mxu0 0.0
    %855 = vmatpush.msra.mxu0 0.0
    %856 = vmatpush.msra.mxu0 0.0
    %857 = vmatpush.msra.mxu0 0.0
    %858 = vmatpush.msra.mxu0 0.0
    %859 = vmatpush.msra.mxu0 0.0
    %860 = vmatpush.msra.mxu0 0.0
    %861 = vmatpush.msra.mxu0 0.0
    %862 = vmatpush.msra.mxu0 0.0
    %863 = vmatpush.msra.mxu0 0.0
    %864 = vmatpush.msra.mxu0 0.0
    %865 = vmatpush.msra.mxu0 %v845
    %866 = vmatmul.f32.gmra.mxu0 %v848
    %v867 = vpop.f32.mrf.mxu0
    %v868 = vadd.f32 0.0, %v867
    %869 = vdwg.mxu0
    %v870 = vmul.f32 %v842, %v816
    %v871 = vmul.f32 %v868, %v817
    %s872 = scalar_lea.vmem [#allocation8], 32
    %v873 = vld [vmem:[%s872] sm:$0xff]
    %v874 = vld [vmem:[%s872 + $0x8] sm:$0xff]
    %v875 = vld [vmem:[%s872 + $0x10] sm:$0xff]
    %v876 = vld [vmem:[%s872 + $0x18] sm:$0xff]
    %s877 = scalar_lea.vmem %s9, 1
    %v878 = vld [vmem:[%s877] sm:$0x1]
    %v880 = vperm.slane %v878, 0
    %v883 = vsel %vm218, %v870, 0
    %v886 = vsel %vm218, %v871, 0
    %888 = vmatpush.msra.mxu0 0.0
    %889 = vmatpush.msra.mxu0 0.0
    %890 = vmatpush.msra.mxu0 0.0
    %891 = vmatpush.msra.mxu0 0.0
    %892 = vmatpush.msra.mxu0 0.0
    %893 = vmatpush.msra.mxu0 0.0
    %894 = vmatpush.msra.mxu0 0.0
    %895 = vmatpush.msra.mxu0 0.0
    %896 = vmatpush.msra.mxu0 0.0
    %897 = vmatpush.msra.mxu0 0.0
    %898 = vmatpush.msra.mxu0 0.0
    %899 = vmatpush.msra.mxu0 0.0
    %900 = vmatpush.msra.mxu0 %v876
    %901 = vmatpush.msra.mxu0 %v875
    %902 = vmatpush.msra.mxu0 %v874
    %903 = vmatpush.msra.mxu0 %v873
    %904 = vmatmul.f32.gmra.mxu0 %v883
    %v905 = vpop.f32.mrf.mxu0
    %v906 = vadd.f32 %v880, %v905
    %907 = vmatmul.f32.gmra.mxu0 %v886
    %v908 = vpop.f32.mrf.mxu0
    %v909 = vadd.f32 %v880, %v908
    %910 = vdwg.mxu0
    %v911 = vadd.f32 %v906, %v703
    %v912 = vadd.f32 %v909, %v704
    %s913 = scalar_lea.vmem %s10, 1
    %v914 = vld [vmem:[%s913] sm:$0x1]
    %s915 = scalar_lea.vmem %s11, 1
    %v916 = vld [vmem:[%s915] sm:$0x1]
    %v917 = vsel %vm218, %v911, 0.0
    %918 = vadd.xlane.f32.xlu0 %v917
    %v919 = vpop.xlane.xlu0 %918
    %v920 = vsel %vm218, %v912, 0.0
    %921 = vadd.xlane.f32.xlu0 %v920
    %v922 = vpop.xlane.xlu0 %921
    %v923 = vmul.f32 %v919, %v231
    %v924 = vmul.f32 %v922, %v231
    %v925 = vsub.f32 %v911, %v923
    %v926 = vsub.f32 %v912, %v924
    %v927 = vmul.f32 %v925, %v925
    %v928 = vmul.f32 %v926, %v926
    %v929 = vsel %vm218, %v927, 0.0
    %930 = vadd.xlane.f32.xlu0 %v929
    %v931 = vpop.xlane.xlu0 %930
    %v932 = vsel %vm218, %v928, 0.0
    %933 = vadd.xlane.f32.xlu0 %v932
    %v934 = vpop.xlane.xlu0 %933
    %v935 = vmul.f32 %v931, %v231
    %v936 = vmul.f32 %v934, %v231
    %v937 = vadd.f32 %v935, 1e-12
    %v938 = vadd.f32 %v936, 1e-12
    %v939 = vrsqrt.pop %v937
    %v940 = vmul.f32 %v939, %v937
    %v941 = vmul.f32 %v940, %v939
    %v942 = vmul.f32 0.5, %v941
    %v943 = vsub.f32 1.5, %v942
    %v944 = vmul.f32 %v939, %v943
    %vm945 = vweird.f32 %v937
    %vm946 = vweird.f32 %v939
    %vm947 = vmor %vm945, %vm946
    %v948 = vsel %vm947, %v939, %v944
    %v949 = vrsqrt.pop %v938
    %v950 = vmul.f32 %v949, %v938
    %v951 = vmul.f32 %v950, %v949
    %v952 = vmul.f32 0.5, %v951
    %v953 = vsub.f32 1.5, %v952
    %v954 = vmul.f32 %v949, %v953
    %vm955 = vweird.f32 %v938
    %vm956 = vweird.f32 %v949
    %vm957 = vmor %vm955, %vm956
    %v958 = vsel %vm957, %v949, %v954
    %v959 = vmul.f32 %v925, %v948
    %v960 = vmul.f32 %v926, %v958
    %v962 = vperm.slane %v914, 0
    %v964 = vmul.f32 %v959, %v962
    %v965 = vmul.f32 %v960, %v962
    %v967 = vperm.slane %v916, 0
    %v969 = vadd.f32 %v964, %v967
    %v970 = vadd.f32 %v965, %v967
    %s971 = scalar_lea.vmem [#allocation9], 32
    %v972 = vld [vmem:[%s971] sm:$0xff]
    %v973 = vld [vmem:[%s971 + $0x8] sm:$0xff]
    %v974 = vld [vmem:[%s971 + $0x10] sm:$0xff]
    %v975 = vld [vmem:[%s971 + $0x18] sm:$0xff]
    %s976 = scalar_lea.vmem %s13, 1
    %v977 = vld [vmem:[%s976] sm:$0x1]
    %v979 = vperm.slane %v977, 0
    %v982 = vsel %vm218, %v969, 0
    %v985 = vsel %vm218, %v970, 0
    %987 = vmatpush.msra.mxu0 0.0
    %988 = vmatpush.msra.mxu0 0.0
    %989 = vmatpush.msra.mxu0 0.0
    %990 = vmatpush.msra.mxu0 0.0
    %991 = vmatpush.msra.mxu0 0.0
    %992 = vmatpush.msra.mxu0 0.0
    %993 = vmatpush.msra.mxu0 0.0
    %994 = vmatpush.msra.mxu0 0.0
    %995 = vmatpush.msra.mxu0 0.0
    %996 = vmatpush.msra.mxu0 0.0
    %997 = vmatpush.msra.mxu0 0.0
    %998 = vmatpush.msra.mxu0 0.0
    %999 = vmatpush.msra.mxu0 %v975
    %1000 = vmatpush.msra.mxu0 %v974
    %1001 = vmatpush.msra.mxu0 %v973
    %1002 = vmatpush.msra.mxu0 %v972
    %1003 = vmatmul.f32.gmra.mxu0 %v982
    %v1004 = vpop.f32.mrf.mxu0
    %v1005 = vadd.f32 %v979, %v1004
    %1006 = vmatmul.f32.gmra.mxu0 %v985
    %v1007 = vpop.f32.mrf.mxu0
    %v1008 = vadd.f32 %v979, %v1007
    %1009 = vdwg.mxu0
    %v1010 = vmul.f32 %v1005, 0.5
    %v1011 = vmul.f32 %v1008, 0.5
    %v1012 = vmul.f32 %v1005, 0.044715
    %v1013 = vmul.f32 %v1008, 0.044715
    %v1014 = vmul.f32 %v1012, %v1005
    %v1015 = vmul.f32 %v1013, %v1008
    %v1016 = vmul.f32 %v1014, %v1005
    %v1017 = vmul.f32 %v1015, %v1008
    %v1018 = vadd.f32 %v1005, %v1016
    %v1019 = vadd.f32 %v1008, %v1017
    %v1020 = vmul.f32 %v1018, 0.7978846
    %v1021 = vmul.f32 %v1019, 0.7978846
    %v1022 = vtanh.pop %v1020
    %v1023 = vtanh.pop %v1021
    %v1024 = vadd.f32 %v1022, 1.0
    %v1025 = vadd.f32 %v1023, 1.0
    %v1026 = vmul.f32 %v1010, %v1024
    %v1027 = vmul.f32 %v1011, %v1025
    %s1028 = scalar_lea.vmem [#allocation11], 64
    %v1029 = vld [vmem:[%s1028] sm:$0xff]
    %v1030 = vld [vmem:[%s1028 + $0x8] sm:$0xff]
    %v1031 = vld [vmem:[%s1028 + $0x10] sm:$0xff]
    %v1032 = vld [vmem:[%s1028 + $0x18] sm:$0xff]
    %v1033 = vld [vmem:[%s1028 + $0x20] sm:$0xff]
    %v1034 = vld [vmem:[%s1028 + $0x28] sm:$0xff]
    %v1035 = vld [vmem:[%s1028 + $0x30] sm:$0xff]
    %v1036 = vld [vmem:[%s1028 + $0x38] sm:$0xff]
    %s1037 = scalar_lea.vmem %s15, 1
    %v1038 = vld [vmem:[%s1037] sm:$0x1]
    %v1040 = vperm.slane %v1038, 0
    %v1043 = vsel %vm617, %v1026, 0
    %v1046 = vsel %vm617, %v1027, 0
    %1048 = vmatpush.msra.mxu0 0.0
    %1049 = vmatpush.msra.mxu0 0.0
    %1050 = vmatpush.msra.mxu0 0.0
    %1051 = vmatpush.msra.mxu0 0.0
    %1052 = vmatpush.msra.mxu0 0.0
    %1053 = vmatpush.msra.mxu0 0.0
    %1054 = vmatpush.msra.mxu0 0.0
    %1055 = vmatpush.msra.mxu0 0.0
    %1056 = vmatpush.msra.mxu0 %v1036
    %1057 = vmatpush.msra.mxu0 %v1035
    %1058 = vmatpush.msra.mxu0 %v1034
    %1059 = vmatpush.msra.mxu0 %v1033
    %1060 = vmatpush.msra.mxu0 %v1032
    %1061 = vmatpush.msra.mxu0 %v1031
    %1062 = vmatpush.msra.mxu0 %v1030
    %1063 = vmatpush.msra.mxu0 %v1029
    %1064 = vmatmul.f32.gmra.mxu0 %v1043
    %v1065 = vpop.f32.mrf.mxu0
    %v1066 = vadd.f32 %v1040, %v1065
    %1067 = vmatmul.f32.gmra.mxu0 %v1046
    %v1068 = vpop.f32.mrf.mxu0
    %v1069 = vadd.f32 %v1040, %v1068
    %1070 = vdwg.mxu0
    %v1071 = vadd.f32 %v1066, %v969
    %v1072 = vadd.f32 %v1069, %v970
    %s1073 = scalar_lea.vmem %s16, 1
    %v1074 = vld [vmem:[%s1073] sm:$0x1]
    %s1075 = scalar_lea.vmem %s17, 1
    %v1076 = vld [vmem:[%s1075] sm:$0x1]
    %v1077 = vsel %vm218, %v1071, 0.0
    %1078 = vadd.xlane.f32.xlu0 %v1077
    %v1079 = vpop.xlane.xlu0 %1078
    %v1080 = vsel %vm218, %v1072, 0.0
    %1081 = vadd.xlane.f32.xlu0 %v1080
    %v1082 = vpop.xlane.xlu0 %1081
    %v1083 = vmul.f32 %v1079, %v231
    %v1084 = vmul.f32 %v1082, %v231
    %v1085 = vsub.f32 %v1071, %v1083
    %v1086 = vsub.f32 %v1072, %v1084
    %v1087 = vmul.f32 %v1085, %v1085
    %v1088 = vmul.f32 %v1086, %v1086
    %v1089 = vsel %vm218, %v1087, 0.0
    %1090 = vadd.xlane.f32.xlu0 %v1089
    %v1091 = vpop.xlane.xlu0 %1090
    %v1092 = vsel %vm218, %v1088, 0.0
    %1093 = vadd.xlane.f32.xlu0 %v1092
    %v1094 = vpop.xlane.xlu0 %1093
    %v1095 = vmul.f32 %v1091, %v231
    %v1096 = vmul.f32 %v1094, %v231
    %v1097 = vadd.f32 %v1095, 1e-12
    %v1098 = vadd.f32 %v1096, 1e-12
    %v1099 = vrsqrt.pop %v1097
    %v1100 = vmul.f32 %v1099, %v1097
    %v1101 = vmul.f32 %v1100, %v1099
    %v1102 = vmul.f32 0.5, %v1101
    %v1103 = vsub.f32 1.5, %v1102
    %v1104 = vmul.f32 %v1099, %v1103
    %vm1105 = vweird.f32 %v1097
    %vm1106 = vweird.f32 %v1099
    %vm1107 = vmor %vm1105, %vm1106
    %v1108 = vsel %vm1107, %v1099, %v1104
    %v1109 = vrsqrt.pop %v1098
    %v1110 = vmul.f32 %v1109, %v1098
    %v1111 = vmul.f32 %v1110, %v1109
    %v1112 = vmul.f32 0.5, %v1111
    %v1113 = vsub.f32 1.5, %v1112
    %v1114 = vmul.f32 %v1109, %v1113
    %vm1115 = vweird.f32 %v1098
    %vm1116 = vweird.f32 %v1109
    %vm1117 = vmor %vm1115, %vm1116
    %v1118 = vsel %vm1117, %v1109, %v1114
    %v1119 = vmul.f32 %v1085, %v1108
    %v1120 = vmul.f32 %v1086, %v1118
    %v1122 = vperm.slane %v1074, 0
    %v1124 = vmul.f32 %v1119, %v1122
    %v1125 = vmul.f32 %v1120, %v1122
    %v1127 = vperm.slane %v1076, 0
    %v1129 = vadd.f32 %v1124, %v1127
    %v1130 = vadd.f32 %v1125, %v1127
    %v1131 = vld [vmem:[%s18] sm:$0xff]
    %v1132 = vld [vmem:[%s18 + $0x8] sm:$0xff]
    %v1133 = vld [vmem:[%s18 + $0x10] sm:$0xff]
    %v1134 = vld [vmem:[%s18 + $0x18] sm:$0xff]
    %v1135 = vld [vmem:[%s19] sm:$0x1]
    %v1137 = vperm.slane %v1135, 0
    %v1141 = vrot.slane %v1130, 7
    %vm1142 = vcmask 1041409
    %v1143 = vsel %vm1142, %v1141, %v1129
    %v1144 = vsel %vm218, %v1143, 0
    %1146 = vmatpush.msra.mxu0 0.0
    %1147 = vmatpush.msra.mxu0 0.0
    %1148 = vmatpush.msra.mxu0 0.0
    %1149 = vmatpush.msra.mxu0 0.0
    %1150 = vmatpush.msra.mxu0 0.0
    %1151 = vmatpush.msra.mxu0 0.0
    %1152 = vmatpush.msra.mxu0 0.0
    %1153 = vmatpush.msra.mxu0 0.0
    %1154 = vmatpush.msra.mxu0 0.0
    %1155 = vmatpush.msra.mxu0 0.0
    %1156 = vmatpush.msra.mxu0 0.0
    %1157 = vmatpush.msra.mxu0 0.0
    %1158 = vmatpush.msra.mxu0 %v1134
    %1159 = vmatpush.msra.mxu0 %v1133
    %1160 = vmatpush.msra.mxu0 %v1132
    %1161 = vmatpush.msra.mxu0 %v1131
    %1162 = vmatmul.f32.gmra.mxu0 %v1144
    %v1163 = vpop.f32.mrf.mxu0
    %v1164 = vadd.f32 %v1137, %v1163
    %1165 = vdwg.mxu0
    %v1166 = vtanh.pop %v1164
    %v1167 = vld [vmem:[%s20] sm:$0x1]
    %v1168 = vld [vmem:[#allocation2] sm:$0x1]
    %1170 = vset.pattern.permute.xlu0 0
    %1171 = vperm.xlu0 %1170, %v1168
    %v1172 = vpop.permute.xlu0 %1171
    %v1174 = vperm.slane %v1172, 0
    %v1176 = vsel %vm218, %v1167, 0
    %v1179 = vsel %vm218, %v1166, 0
    %1181 = vmatpush.xpose.msra.mxu0 0.0
    %1182 = vmatpush.xpose.msra.mxu0 0.0
    %1183 = vmatpush.xpose.msra.mxu0 0.0
    %1184 = vmatpush.xpose.msra.mxu0 0.0
    %1185 = vmatpush.xpose.msra.mxu0 0.0
    %1186 = vmatpush.xpose.msra.mxu0 0.0
    %1187 = vmatpush.xpose.msra.mxu0 0.0
    %1188 = vmatpush.xpose.msra.mxu0 0.0
    %1189 = vmatpush.xpose.msra.mxu0 0.0
    %1190 = vmatpush.xpose.msra.mxu0 0.0
    %1191 = vmatpush.xpose.msra.mxu0 0.0
    %1192 = vmatpush.xpose.msra.mxu0 0.0
    %1193 = vmatpush.xpose.msra.mxu0 0.0
    %1194 = vmatpush.xpose.msra.mxu0 0.0
    %1195 = vmatpush.xpose.msra.mxu0 0.0
    %1196 = vmatpush.xpose.msra.mxu0 %v1179
    %1197 = vmatmul.f32.gmra.mxu0 %v1176
    %v1198 = vpop.f32.mrf.mxu0
    %v1199 = vadd.f32 %v1174, %v1198
    %1200 = vdwg.mxu0
    %vm1201 = vcmask 8192
    %1202 = vst.msk [vmem:[#allocation12] sm:$0x1] %vm1201, %v1199
    // Predicated region
    $region110: #{_lambda_.1} parent=1 // pred_check
      _
    $region111: #{_lambda_.1} parent=1 // pred_check_branch
      %1204 = sbr.rel (0) target = $region113
    $region112: #{_lambda_.1} parent=1 // pred_region
      %1206 = vsyncadd [#allocation5], 0
      %s1208 = sshll.u32 [#allocation12], 4
      %s1209 = int_to_ptr.vmem [resolvable:$true] %s1208
      %s1210 = sshll.u32 %s22, 4
      %s1211 = int_to_ptr.hbm [resolvable:$true] %s1210
      %1213 = dma.vmem_to_hbm [thread:$0]  %s1209, 16, %s1211, [#allocation5]
    $region113: #{_lambda_.1} parent=1 // pred_fallthru
      _
    // Predicated region
    $region114: #{_lambda_.1} parent=1 // pred_check
      _
    $region115: #{_lambda_.1} parent=1 // pred_check_branch
      %1215 = sbr.rel (0) target = $region117
    $region116: #{_lambda_.1} parent=1 // pred_region
      %1217 = dma.done [#allocation5], 16
    $region117: #{_lambda_.1} parent=1 // pred_fallthru
      _
    %1218 = vsyncpa [#allocation4], 1
    %1219 = vsyncpa [#allocation7], 1
    %1220 = vsyncpa [#allocation10], 1
    %1221 = vsyncpa [#allocation5], 1

</llo_original>
